<compile_context>
chip_gen: v6e
topology: v6e:2x2x1
jax: 0.10.0
libtpu: 0.0.40
codegen_flags: <defaults>
</compile_context>

<pallas_src>
import functools
import math

import jax
import jax.numpy as jnp
from jax import lax
from jax.experimental import pallas as pl
from jax.experimental.pallas import tpu as pltpu


_SQRT_2_OVER_PI = math.sqrt(2.0 / math.pi)
_LN_EPS = 1e-5
_NEG_INF = -1e30  # finite "-inf": exp underflows to exactly 0 after max-sub


def _gelu(x):
    # tanh-approx GELU, identical formula to the PyTorch GELU module.
    return 0.5 * x * (1.0 + jnp.tanh(_SQRT_2_OVER_PI * (x + 0.044715 * (x * x * x))))


def _layernorm(x, scale, shift):
    mean = jnp.mean(x, axis=-1, keepdims=True)
    var = jnp.mean(jnp.square(x - mean), axis=-1, keepdims=True)
    return scale * ((x - mean) / jnp.sqrt(var + _LN_EPS)) + shift


def _transformer_block_kernel(
    x_ref,
    ln1_s_ref, ln1_b_ref,
    wq_ref, wk_ref, wv_ref,
    wo_ref, bo_ref,
    ln2_s_ref, ln2_b_ref,
    w1_ref, b1_ref, w2_ref, b2_ref,
    o_ref,
    *, num_heads, head_dim,
):
    x = x_ref[0].astype(jnp.float32)          # (T, D) for this batch element
    T = x.shape[0]

    # ---------------- LayerNorm1 + causal multi-head attention -------------
    xn = _layernorm(x, ln1_s_ref[...], ln1_b_ref[...])
    q = jnp.dot(xn, wq_ref[...], preferred_element_type=jnp.float32)
    k = jnp.dot(xn, wk_ref[...], preferred_element_type=jnp.float32)
    v = jnp.dot(xn, wv_ref[...], preferred_element_type=jnp.float32)
    wo = wo_ref[...]

    row = lax.broadcasted_iota(jnp.int32, (T, T), 0)
    col = lax.broadcasted_iota(jnp.int32, (T, T), 1)
    causal = col <= row
    inv_scale = 1.0 / math.sqrt(head_dim)

    # Per-head attention; output projection folded in as a sum over heads
    # (equivalent to concat(heads) @ W_o, avoids an in-kernel concatenate).
    attn = jnp.zeros_like(x)
    for h in range(num_heads):
        lo = h * head_dim
        qh = q[:, lo:lo + head_dim]
        kh = k[:, lo:lo + head_dim]
        vh = v[:, lo:lo + head_dim]
        s = lax.dot_general(qh, kh, (((1,), (1,)), ((), ())),
                            preferred_element_type=jnp.float32) * inv_scale
        s = jnp.where(causal, s, _NEG_INF)
        s = s - jnp.max(s, axis=-1, keepdims=True)
        p = jnp.exp(s)
        p = p / jnp.sum(p, axis=-1, keepdims=True)
        ctx_h = jnp.dot(p, vh, preferred_element_type=jnp.float32)        # (T, hd)
        attn = attn + jnp.dot(ctx_h, wo[lo:lo + head_dim, :],
                              preferred_element_type=jnp.float32)
    attn = attn + bo_ref[...]
    x1 = x + attn                              # residual (dropout = identity)

    # ---------------- LayerNorm2 + FeedForward ------------------------------
    xn2 = _layernorm(x1, ln2_s_ref[...], ln2_b_ref[...])
    hcur = jnp.dot(xn2, w1_ref[...], preferred_element_type=jnp.float32) + b1_ref[...]
    hcur = _gelu(hcur)
    ff = jnp.dot(hcur, w2_ref[...], preferred_element_type=jnp.float32) + b2_ref[...]

    o_ref[0] = (x1 + ff).astype(o_ref.dtype)   # residual (dropout = identity)


def transformer_block_pallas(x, params):
    B, T, D = x.shape
    H = params["n_heads"]
    hd = D // H
    hidden = params["w1"].shape[1]

    weights = (
        params["ln1_scale"], params["ln1_shift"],
        params["wq"], params["wk"], params["wv"],
        params["wo"], params["bo"],
        params["ln2_scale"], params["ln2_shift"],
        params["w1"], params["b1"], params["w2"], params["b2"],
    )

    kernel = functools.partial(_transformer_block_kernel,
                               num_heads=H, head_dim=hd)

    seq_spec = pl.BlockSpec((1, T, D), lambda b: (b, 0, 0))
    w_specs = [pl.BlockSpec(w.shape, lambda b: (0, 0)) for w in weights]

    flops = (2 * B * T * D * D * 4            # q/k/v/out projections
             + 2 * B * T * T * D * 2          # scores + context
             + 2 * B * T * D * hidden * 2)    # feed-forward
    transcendentals = B * T * hidden + B * H * T * T      # tanh + exp
    bytes_accessed = 4 * (2 * x.size + sum(int(w.size) for w in weights))

    return pl.pallas_call(
        kernel,
        out_shape=jax.ShapeDtypeStruct((B, T, D), x.dtype),
        grid_spec=pl.GridSpec(
            grid=(B,),
            in_specs=[seq_spec] + w_specs,
            out_specs=seq_spec,
        ),
        compiler_params=pltpu.CompilerParams(
            dimension_semantics=("parallel",),
        ),
        cost_estimate=pl.CostEstimate(
            flops=flops,
            transcendentals=transcendentals,
            bytes_accessed=bytes_accessed,
        ),
    )(x, *weights)


def transformer_block_ref(x, params):
    """Pure-JAX reference mirroring the PyTorch TransformerBlock forward."""
    B, T, D = x.shape
    H = params["n_heads"]
    hd = D // H

    def layernorm(v, s, b):
        mean = jnp.mean(v, axis=-1, keepdims=True)
        var = jnp.mean(jnp.square(v - mean), axis=-1, keepdims=True)
        return s * ((v - mean) / jnp.sqrt(var + _LN_EPS)) + b

    shortcut = x
    xn = layernorm(x, params["ln1_scale"], params["ln1_shift"])
    q = (xn @ params["wq"]).reshape(B, T, H, hd).transpose(0, 2, 1, 3)
    k = (xn @ params["wk"]).reshape(B, T, H, hd).transpose(0, 2, 1, 3)
    v = (xn @ params["wv"]).reshape(B, T, H, hd).transpose(0, 2, 1, 3)
    scores = jnp.einsum("bhqd,bhkd->bhqk", q, k) / math.sqrt(hd)
    causal = jnp.tril(jnp.ones((T, T), dtype=bool))
    scores = jnp.where(causal[None, None], scores, _NEG_INF)
    w = jax.nn.softmax(scores, axis=-1)
    ctx = jnp.einsum("bhqk,bhkd->bhqd", w, v).transpose(0, 2, 1, 3).reshape(B, T, D)
    x1 = shortcut + (ctx @ params["wo"] + params["bo"])

    xn2 = layernorm(x1, params["ln2_scale"], params["ln2_shift"])
    h = xn2 @ params["w1"] + params["b1"]
    h = 0.5 * h * (1.0 + jnp.tanh(_SQRT_2_OVER_PI * (h + 0.044715 * h ** 3)))
    return x1 + (h @ params["w2"] + params["b2"])


if __name__ == "__main__":
    # cfg: emb_dim=32, ctx_len=8, n_heads=4, drop_rate=0.0, qkv_bias=False
    B, T, D, H = 2, 8, 32, 4
    hidden = 4 * D

    key = jax.random.PRNGKey(0)
    keys = jax.random.split(key, 10)

    def init(k, shape, fan_in):
        return jax.random.normal(k, shape, dtype=jnp.float32) / math.sqrt(fan_in)

    params = {
        "n_heads": H,
        "ln1_scale": jnp.ones((1, D), jnp.float32),
        "ln1_shift": jnp.zeros((1, D), jnp.float32),
        "wq": init(keys[0], (D, D), D),
        "wk": init(keys[1], (D, D), D),
        "wv": init(keys[2], (D, D), D),
        "wo": init(keys[3], (D, D), D),
        "bo": init(keys[4], (1, D), D),
        "ln2_scale": jnp.ones((1, D), jnp.float32),
        "ln2_shift": jnp.zeros((1, D), jnp.float32),
        "w1": init(keys[5], (D, hidden), D),
        "b1": init(keys[6], (1, hidden), D),
        "w2": init(keys[7], (hidden, D), hidden),
        "b2": init(keys[8], (1, D), hidden),
    }
    x = jax.random.normal(keys[9], (B, T, D), dtype=jnp.float32)

    y = transformer_block_pallas(x, params)
    jax.block_until_ready(y)

    y_ref = transformer_block_ref(x, params)
    assert y.shape == x.shape and y.dtype == x.dtype
    max_err = float(jnp.max(jnp.abs(y - y_ref)))
    assert jnp.allclose(y, y_ref, atol=5e-3, rtol=5e-3), f"mismatch vs ref, max_err={max_err}"

    print("KERNEL_OK")
</pallas_src>

<mosaic_0001>
module attributes {stable_mosaic.version = 11 : i64} {
  func.func @_transformer_block_kernel(%arg0: i32, %arg1: memref<1x8x32xf32, #tpu.memory_space<vmem>>, %arg2: memref<1x32xf32, #tpu.memory_space<vmem>>, %arg3: memref<1x32xf32, #tpu.memory_space<vmem>>, %arg4: memref<32x32xf32, #tpu.memory_space<vmem>>, %arg5: memref<32x32xf32, #tpu.memory_space<vmem>>, %arg6: memref<32x32xf32, #tpu.memory_space<vmem>>, %arg7: memref<32x32xf32, #tpu.memory_space<vmem>>, %arg8: memref<1x32xf32, #tpu.memory_space<vmem>>, %arg9: memref<1x32xf32, #tpu.memory_space<vmem>>, %arg10: memref<1x32xf32, #tpu.memory_space<vmem>>, %arg11: memref<32x128xf32, #tpu.memory_space<vmem>>, %arg12: memref<1x128xf32, #tpu.memory_space<vmem>>, %arg13: memref<128x32xf32, #tpu.memory_space<vmem>>, %arg14: memref<1x32xf32, #tpu.memory_space<vmem>>, %arg15: memref<1x8x32xf32, #tpu.memory_space<vmem>>) attributes {dimension_semantics = [#tpu.dimension_semantics<parallel>], iteration_bounds = array<i64: 2>, scalar_prefetch = 0 : i64, scratch_operands = 0 : i64, tpu.core_type = #tpu.core_type<tc>, window_params = [{transform_indices = @transform_0, window_bounds = array<i64: 1, 8, 32>}, {pipeline_mode = #tpu.pipeline_mode<synchronous>, transform_indices = @transform_1, window_bounds = array<i64: 1, 32>}, {pipeline_mode = #tpu.pipeline_mode<synchronous>, transform_indices = @transform_2, window_bounds = array<i64: 1, 32>}, {pipeline_mode = #tpu.pipeline_mode<synchronous>, transform_indices = @transform_3, window_bounds = array<i64: 32, 32>}, {pipeline_mode = #tpu.pipeline_mode<synchronous>, transform_indices = @transform_4, window_bounds = array<i64: 32, 32>}, {pipeline_mode = #tpu.pipeline_mode<synchronous>, transform_indices = @transform_5, window_bounds = array<i64: 32, 32>}, {pipeline_mode = #tpu.pipeline_mode<synchronous>, transform_indices = @transform_6, window_bounds = array<i64: 32, 32>}, {pipeline_mode = #tpu.pipeline_mode<synchronous>, transform_indices = @transform_7, window_bounds = array<i64: 1, 32>}, {pipeline_mode = #tpu.pipeline_mode<synchronous>, transform_indices = @transform_8, window_bounds = array<i64: 1, 32>}, {pipeline_mode = #tpu.pipeline_mode<synchronous>, transform_indices = @transform_9, window_bounds = array<i64: 1, 32>}, {pipeline_mode = #tpu.pipeline_mode<synchronous>, transform_indices = @transform_10, window_bounds = array<i64: 32, 128>}, {pipeline_mode = #tpu.pipeline_mode<synchronous>, transform_indices = @transform_11, window_bounds = array<i64: 1, 128>}, {pipeline_mode = #tpu.pipeline_mode<synchronous>, transform_indices = @transform_12, window_bounds = array<i64: 128, 32>}, {pipeline_mode = #tpu.pipeline_mode<synchronous>, transform_indices = @transform_13, window_bounds = array<i64: 1, 32>}, {transform_indices = @transform_14, window_bounds = array<i64: 1, 8, 32>}]} {
    %c0 = arith.constant 0 : index
    %c0_0 = arith.constant 0 : index
    %c0_1 = arith.constant 0 : index
    %0 = vector.load %arg1[%c0, %c0_0, %c0_1] : memref<1x8x32xf32, #tpu.memory_space<vmem>>, vector<1x8x32xf32>
    %1 = vector.shape_cast %0 : vector<1x8x32xf32> to vector<8x32xf32>
    %c0_2 = arith.constant 0 : index
    %c0_3 = arith.constant 0 : index
    %2 = vector.load %arg2[%c0_2, %c0_3] : memref<1x32xf32, #tpu.memory_space<vmem>>, vector<1x32xf32>
    %c0_4 = arith.constant 0 : index
    %c0_5 = arith.constant 0 : index
    %3 = vector.load %arg3[%c0_4, %c0_5] : memref<1x32xf32, #tpu.memory_space<vmem>>, vector<1x32xf32>
    %cst = arith.constant dense<0.000000e+00> : vector<8xf32>
    %4 = vector.multi_reduction <add>, %1, %cst [1] : vector<8x32xf32> to vector<8xf32>
    %5 = vector.shape_cast %4 : vector<8xf32> to vector<8x1xf32>
    %cst_6 = arith.constant 3.200000e+01 : f32
    %6 = vector.broadcast %cst_6 : f32 to vector<8x1xf32>
    %7 = arith.divf %5, %6 : vector<8x1xf32>
    %8 = vector.broadcast %7 : vector<8x1xf32> to vector<8x32xf32>
    %9 = arith.subf %1, %8 : vector<8x32xf32>
    %10 = arith.mulf %9, %9 : vector<8x32xf32>
    %cst_7 = arith.constant dense<0.000000e+00> : vector<8xf32>
    %11 = vector.multi_reduction <add>, %10, %cst_7 [1] : vector<8x32xf32> to vector<8xf32>
    %12 = vector.shape_cast %11 : vector<8xf32> to vector<8x1xf32>
    %cst_8 = arith.constant 3.200000e+01 : f32
    %13 = vector.broadcast %cst_8 : f32 to vector<8x1xf32>
    %14 = arith.divf %12, %13 : vector<8x1xf32>
    %15 = vector.broadcast %7 : vector<8x1xf32> to vector<8x32xf32>
    %16 = arith.subf %1, %15 : vector<8x32xf32>
    %cst_9 = arith.constant 9.99999974E-6 : f32
    %17 = vector.broadcast %cst_9 : f32 to vector<8x1xf32>
    %18 = arith.addf %14, %17 : vector<8x1xf32>
    %19 = math.sqrt %18 : vector<8x1xf32>
    %20 = vector.broadcast %19 : vector<8x1xf32> to vector<8x32xf32>
    %21 = arith.divf %16, %20 : vector<8x32xf32>
    %22 = vector.broadcast %2 : vector<1x32xf32> to vector<8x32xf32>
    %23 = arith.mulf %22, %21 : vector<8x32xf32>
    %24 = vector.broadcast %3 : vector<1x32xf32> to vector<8x32xf32>
    %25 = arith.addf %23, %24 : vector<8x32xf32>
    %c0_10 = arith.constant 0 : index
    %c0_11 = arith.constant 0 : index
    %26 = vector.load %arg4[%c0_10, %c0_11] : memref<32x32xf32, #tpu.memory_space<vmem>>, vector<32x32xf32>
    %cst_12 = arith.constant dense<0.000000e+00> : vector<8x32xf32>
    %27 = tpu.matmul %25, %26, %cst_12 {dimension_numbers = #tpu.dot_dimension_numbers<[1], [0], [0], [1], [0, 0, 1, 1], [], []>} : vector<8x32xf32>, vector<32x32xf32>, vector<8x32xf32> -> vector<8x32xf32>
    %c0_13 = arith.constant 0 : index
    %c0_14 = arith.constant 0 : index
    %28 = vector.load %arg5[%c0_13, %c0_14] : memref<32x32xf32, #tpu.memory_space<vmem>>, vector<32x32xf32>
    %cst_15 = arith.constant dense<0.000000e+00> : vector<8x32xf32>
    %29 = tpu.matmul %25, %28, %cst_15 {dimension_numbers = #tpu.dot_dimension_numbers<[1], [0], [0], [1], [0, 0, 1, 1], [], []>} : vector<8x32xf32>, vector<32x32xf32>, vector<8x32xf32> -> vector<8x32xf32>
    %c0_16 = arith.constant 0 : index
    %c0_17 = arith.constant 0 : index
    %30 = vector.load %arg6[%c0_16, %c0_17] : memref<32x32xf32, #tpu.memory_space<vmem>>, vector<32x32xf32>
    %cst_18 = arith.constant dense<0.000000e+00> : vector<8x32xf32>
    %31 = tpu.matmul %25, %30, %cst_18 {dimension_numbers = #tpu.dot_dimension_numbers<[1], [0], [0], [1], [0, 0, 1, 1], [], []>} : vector<8x32xf32>, vector<32x32xf32>, vector<8x32xf32> -> vector<8x32xf32>
    %c0_19 = arith.constant 0 : index
    %c0_20 = arith.constant 0 : index
    %32 = vector.load %arg7[%c0_19, %c0_20] : memref<32x32xf32, #tpu.memory_space<vmem>>, vector<32x32xf32>
    %33 = tpu.iota {dimensions = array<i32: 0>} : vector<8x8xi32>
    %34 = tpu.iota {dimensions = array<i32: 1>} : vector<8x8xi32>
    %35 = arith.cmpi sle, %34, %33 : vector<8x8xi32>
    %cst_21 = arith.constant 0.000000e+00 : f32
    %36 = vector.broadcast %cst_21 : f32 to vector<8x32xf32>
    %37 = vector.extract_strided_slice %27 {offsets = [0, 0], sizes = [8, 8], strides = [1, 1]} : vector<8x32xf32> to vector<8x8xf32>
    %38 = vector.extract_strided_slice %29 {offsets = [0, 0], sizes = [8, 8], strides = [1, 1]} : vector<8x32xf32> to vector<8x8xf32>
    %39 = vector.extract_strided_slice %31 {offsets = [0, 0], sizes = [8, 8], strides = [1, 1]} : vector<8x32xf32> to vector<8x8xf32>
    %cst_22 = arith.constant dense<0.000000e+00> : vector<8x8xf32>
    %40 = tpu.matmul %37, %38, %cst_22 {dimension_numbers = #tpu.dot_dimension_numbers<[1], [1], [0], [0], [0, 0, 1, 0], [], []>} : vector<8x8xf32>, vector<8x8xf32>, vector<8x8xf32> -> vector<8x8xf32>
    %cst_23 = arith.constant 0.353553385 : f32
    %41 = vector.broadcast %cst_23 : f32 to vector<8x8xf32>
    %42 = arith.mulf %40, %41 : vector<8x8xf32>
    %cst_24 = arith.constant -1.000000e+30 : f32
    %43 = vector.broadcast %cst_24 : f32 to vector<8x8xf32>
    %44 = arith.select %35, %42, %43 : vector<8x8xi1>, vector<8x8xf32>
    %cst_25 = arith.constant dense<0xFF800000> : vector<8xf32>
    %45 = vector.multi_reduction <maximumf>, %44, %cst_25 [1] : vector<8x8xf32> to vector<8xf32>
    %46 = vector.shape_cast %45 : vector<8xf32> to vector<8x1xf32>
    %47 = vector.broadcast %46 : vector<8x1xf32> to vector<8x8xf32>
    %48 = arith.subf %44, %47 : vector<8x8xf32>
    %49 = math.exp %48 : vector<8x8xf32>
    %cst_26 = arith.constant dense<0.000000e+00> : vector<8xf32>
    %50 = vector.multi_reduction <add>, %49, %cst_26 [1] : vector<8x8xf32> to vector<8xf32>
    %51 = vector.shape_cast %50 : vector<8xf32> to vector<8x1xf32>
    %52 = vector.broadcast %51 : vector<8x1xf32> to vector<8x8xf32>
    %53 = arith.divf %49, %52 : vector<8x8xf32>
    %cst_27 = arith.constant dense<0.000000e+00> : vector<8x8xf32>
    %54 = tpu.matmul %53, %39, %cst_27 {dimension_numbers = #tpu.dot_dimension_numbers<[1], [0], [0], [1], [0, 0, 1, 1], [], []>} : vector<8x8xf32>, vector<8x8xf32>, vector<8x8xf32> -> vector<8x8xf32>
    %55 = vector.extract_strided_slice %32 {offsets = [0, 0], sizes = [8, 32], strides = [1, 1]} : vector<32x32xf32> to vector<8x32xf32>
    %cst_28 = arith.constant dense<0.000000e+00> : vector<8x32xf32>
    %56 = tpu.matmul %54, %55, %cst_28 {dimension_numbers = #tpu.dot_dimension_numbers<[1], [0], [0], [1], [0, 0, 1, 1], [], []>} : vector<8x8xf32>, vector<8x32xf32>, vector<8x32xf32> -> vector<8x32xf32>
    %57 = arith.addf %36, %56 : vector<8x32xf32>
    %58 = vector.extract_strided_slice %27 {offsets = [0, 8], sizes = [8, 8], strides = [1, 1]} : vector<8x32xf32> to vector<8x8xf32>
    %59 = vector.extract_strided_slice %29 {offsets = [0, 8], sizes = [8, 8], strides = [1, 1]} : vector<8x32xf32> to vector<8x8xf32>
    %60 = vector.extract_strided_slice %31 {offsets = [0, 8], sizes = [8, 8], strides = [1, 1]} : vector<8x32xf32> to vector<8x8xf32>
    %cst_29 = arith.constant dense<0.000000e+00> : vector<8x8xf32>
    %61 = tpu.matmul %58, %59, %cst_29 {dimension_numbers = #tpu.dot_dimension_numbers<[1], [1], [0], [0], [0, 0, 1, 0], [], []>} : vector<8x8xf32>, vector<8x8xf32>, vector<8x8xf32> -> vector<8x8xf32>
    %cst_30 = arith.constant 0.353553385 : f32
    %62 = vector.broadcast %cst_30 : f32 to vector<8x8xf32>
    %63 = arith.mulf %61, %62 : vector<8x8xf32>
    %cst_31 = arith.constant -1.000000e+30 : f32
    %64 = vector.broadcast %cst_31 : f32 to vector<8x8xf32>
    %65 = arith.select %35, %63, %64 : vector<8x8xi1>, vector<8x8xf32>
    %cst_32 = arith.constant dense<0xFF800000> : vector<8xf32>
    %66 = vector.multi_reduction <maximumf>, %65, %cst_32 [1] : vector<8x8xf32> to vector<8xf32>
    %67 = vector.shape_cast %66 : vector<8xf32> to vector<8x1xf32>
    %68 = vector.broadcast %67 : vector<8x1xf32> to vector<8x8xf32>
    %69 = arith.subf %65, %68 : vector<8x8xf32>
    %70 = math.exp %69 : vector<8x8xf32>
    %cst_33 = arith.constant dense<0.000000e+00> : vector<8xf32>
    %71 = vector.multi_reduction <add>, %70, %cst_33 [1] : vector<8x8xf32> to vector<8xf32>
    %72 = vector.shape_cast %71 : vector<8xf32> to vector<8x1xf32>
    %73 = vector.broadcast %72 : vector<8x1xf32> to vector<8x8xf32>
    %74 = arith.divf %70, %73 : vector<8x8xf32>
    %cst_34 = arith.constant dense<0.000000e+00> : vector<8x8xf32>
    %75 = tpu.matmul %74, %60, %cst_34 {dimension_numbers = #tpu.dot_dimension_numbers<[1], [0], [0], [1], [0, 0, 1, 1], [], []>} : vector<8x8xf32>, vector<8x8xf32>, vector<8x8xf32> -> vector<8x8xf32>
    %76 = vector.extract_strided_slice %32 {offsets = [8, 0], sizes = [8, 32], strides = [1, 1]} : vector<32x32xf32> to vector<8x32xf32>
    %cst_35 = arith.constant dense<0.000000e+00> : vector<8x32xf32>
    %77 = tpu.matmul %75, %76, %cst_35 {dimension_numbers = #tpu.dot_dimension_numbers<[1], [0], [0], [1], [0, 0, 1, 1], [], []>} : vector<8x8xf32>, vector<8x32xf32>, vector<8x32xf32> -> vector<8x32xf32>
    %78 = arith.addf %57, %77 : vector<8x32xf32>
    %79 = vector.extract_strided_slice %27 {offsets = [0, 16], sizes = [8, 8], strides = [1, 1]} : vector<8x32xf32> to vector<8x8xf32>
    %80 = vector.extract_strided_slice %29 {offsets = [0, 16], sizes = [8, 8], strides = [1, 1]} : vector<8x32xf32> to vector<8x8xf32>
    %81 = vector.extract_strided_slice %31 {offsets = [0, 16], sizes = [8, 8], strides = [1, 1]} : vector<8x32xf32> to vector<8x8xf32>
    %cst_36 = arith.constant dense<0.000000e+00> : vector<8x8xf32>
    %82 = tpu.matmul %79, %80, %cst_36 {dimension_numbers = #tpu.dot_dimension_numbers<[1], [1], [0], [0], [0, 0, 1, 0], [], []>} : vector<8x8xf32>, vector<8x8xf32>, vector<8x8xf32> -> vector<8x8xf32>
    %cst_37 = arith.constant 0.353553385 : f32
    %83 = vector.broadcast %cst_37 : f32 to vector<8x8xf32>
    %84 = arith.mulf %82, %83 : vector<8x8xf32>
    %cst_38 = arith.constant -1.000000e+30 : f32
    %85 = vector.broadcast %cst_38 : f32 to vector<8x8xf32>
    %86 = arith.select %35, %84, %85 : vector<8x8xi1>, vector<8x8xf32>
    %cst_39 = arith.constant dense<0xFF800000> : vector<8xf32>
    %87 = vector.multi_reduction <maximumf>, %86, %cst_39 [1] : vector<8x8xf32> to vector<8xf32>
    %88 = vector.shape_cast %87 : vector<8xf32> to vector<8x1xf32>
    %89 = vector.broadcast %88 : vector<8x1xf32> to vector<8x8xf32>
    %90 = arith.subf %86, %89 : vector<8x8xf32>
    %91 = math.exp %90 : vector<8x8xf32>
    %cst_40 = arith.constant dense<0.000000e+00> : vector<8xf32>
    %92 = vector.multi_reduction <add>, %91, %cst_40 [1] : vector<8x8xf32> to vector<8xf32>
    %93 = vector.shape_cast %92 : vector<8xf32> to vector<8x1xf32>
    %94 = vector.broadcast %93 : vector<8x1xf32> to vector<8x8xf32>
    %95 = arith.divf %91, %94 : vector<8x8xf32>
    %cst_41 = arith.constant dense<0.000000e+00> : vector<8x8xf32>
    %96 = tpu.matmul %95, %81, %cst_41 {dimension_numbers = #tpu.dot_dimension_numbers<[1], [0], [0], [1], [0, 0, 1, 1], [], []>} : vector<8x8xf32>, vector<8x8xf32>, vector<8x8xf32> -> vector<8x8xf32>
    %97 = vector.extract_strided_slice %32 {offsets = [16, 0], sizes = [8, 32], strides = [1, 1]} : vector<32x32xf32> to vector<8x32xf32>
    %cst_42 = arith.constant dense<0.000000e+00> : vector<8x32xf32>
    %98 = tpu.matmul %96, %97, %cst_42 {dimension_numbers = #tpu.dot_dimension_numbers<[1], [0], [0], [1], [0, 0, 1, 1], [], []>} : vector<8x8xf32>, vector<8x32xf32>, vector<8x32xf32> -> vector<8x32xf32>
    %99 = arith.addf %78, %98 : vector<8x32xf32>
    %100 = vector.extract_strided_slice %27 {offsets = [0, 24], sizes = [8, 8], strides = [1, 1]} : vector<8x32xf32> to vector<8x8xf32>
    %101 = vector.extract_strided_slice %29 {offsets = [0, 24], sizes = [8, 8], strides = [1, 1]} : vector<8x32xf32> to vector<8x8xf32>
    %102 = vector.extract_strided_slice %31 {offsets = [0, 24], sizes = [8, 8], strides = [1, 1]} : vector<8x32xf32> to vector<8x8xf32>
    %cst_43 = arith.constant dense<0.000000e+00> : vector<8x8xf32>
    %103 = tpu.matmul %100, %101, %cst_43 {dimension_numbers = #tpu.dot_dimension_numbers<[1], [1], [0], [0], [0, 0, 1, 0], [], []>} : vector<8x8xf32>, vector<8x8xf32>, vector<8x8xf32> -> vector<8x8xf32>
    %cst_44 = arith.constant 0.353553385 : f32
    %104 = vector.broadcast %cst_44 : f32 to vector<8x8xf32>
    %105 = arith.mulf %103, %104 : vector<8x8xf32>
    %cst_45 = arith.constant -1.000000e+30 : f32
    %106 = vector.broadcast %cst_45 : f32 to vector<8x8xf32>
    %107 = arith.select %35, %105, %106 : vector<8x8xi1>, vector<8x8xf32>
    %cst_46 = arith.constant dense<0xFF800000> : vector<8xf32>
    %108 = vector.multi_reduction <maximumf>, %107, %cst_46 [1] : vector<8x8xf32> to vector<8xf32>
    %109 = vector.shape_cast %108 : vector<8xf32> to vector<8x1xf32>
    %110 = vector.broadcast %109 : vector<8x1xf32> to vector<8x8xf32>
    %111 = arith.subf %107, %110 : vector<8x8xf32>
    %112 = math.exp %111 : vector<8x8xf32>
    %cst_47 = arith.constant dense<0.000000e+00> : vector<8xf32>
    %113 = vector.multi_reduction <add>, %112, %cst_47 [1] : vector<8x8xf32> to vector<8xf32>
    %114 = vector.shape_cast %113 : vector<8xf32> to vector<8x1xf32>
    %115 = vector.broadcast %114 : vector<8x1xf32> to vector<8x8xf32>
    %116 = arith.divf %112, %115 : vector<8x8xf32>
    %cst_48 = arith.constant dense<0.000000e+00> : vector<8x8xf32>
    %117 = tpu.matmul %116, %102, %cst_48 {dimension_numbers = #tpu.dot_dimension_numbers<[1], [0], [0], [1], [0, 0, 1, 1], [], []>} : vector<8x8xf32>, vector<8x8xf32>, vector<8x8xf32> -> vector<8x8xf32>
    %118 = vector.extract_strided_slice %32 {offsets = [24, 0], sizes = [8, 32], strides = [1, 1]} : vector<32x32xf32> to vector<8x32xf32>
    %cst_49 = arith.constant dense<0.000000e+00> : vector<8x32xf32>
    %119 = tpu.matmul %117, %118, %cst_49 {dimension_numbers = #tpu.dot_dimension_numbers<[1], [0], [0], [1], [0, 0, 1, 1], [], []>} : vector<8x8xf32>, vector<8x32xf32>, vector<8x32xf32> -> vector<8x32xf32>
    %120 = arith.addf %99, %119 : vector<8x32xf32>
    %c0_50 = arith.constant 0 : index
    %c0_51 = arith.constant 0 : index
    %121 = vector.load %arg8[%c0_50, %c0_51] : memref<1x32xf32, #tpu.memory_space<vmem>>, vector<1x32xf32>
    %122 = vector.broadcast %121 : vector<1x32xf32> to vector<8x32xf32>
    %123 = arith.addf %120, %122 : vector<8x32xf32>
    %124 = arith.addf %1, %123 : vector<8x32xf32>
    %c0_52 = arith.constant 0 : index
    %c0_53 = arith.constant 0 : index
    %125 = vector.load %arg9[%c0_52, %c0_53] : memref<1x32xf32, #tpu.memory_space<vmem>>, vector<1x32xf32>
    %c0_54 = arith.constant 0 : index
    %c0_55 = arith.constant 0 : index
    %126 = vector.load %arg10[%c0_54, %c0_55] : memref<1x32xf32, #tpu.memory_space<vmem>>, vector<1x32xf32>
    %cst_56 = arith.constant dense<0.000000e+00> : vector<8xf32>
    %127 = vector.multi_reduction <add>, %124, %cst_56 [1] : vector<8x32xf32> to vector<8xf32>
    %128 = vector.shape_cast %127 : vector<8xf32> to vector<8x1xf32>
    %cst_57 = arith.constant 3.200000e+01 : f32
    %129 = vector.broadcast %cst_57 : f32 to vector<8x1xf32>
    %130 = arith.divf %128, %129 : vector<8x1xf32>
    %131 = vector.broadcast %130 : vector<8x1xf32> to vector<8x32xf32>
    %132 = arith.subf %124, %131 : vector<8x32xf32>
    %133 = arith.mulf %132, %132 : vector<8x32xf32>
    %cst_58 = arith.constant dense<0.000000e+00> : vector<8xf32>
    %134 = vector.multi_reduction <add>, %133, %cst_58 [1] : vector<8x32xf32> to vector<8xf32>
    %135 = vector.shape_cast %134 : vector<8xf32> to vector<8x1xf32>
    %cst_59 = arith.constant 3.200000e+01 : f32
    %136 = vector.broadcast %cst_59 : f32 to vector<8x1xf32>
    %137 = arith.divf %135, %136 : vector<8x1xf32>
    %138 = vector.broadcast %130 : vector<8x1xf32> to vector<8x32xf32>
    %139 = arith.subf %124, %138 : vector<8x32xf32>
    %cst_60 = arith.constant 9.99999974E-6 : f32
    %140 = vector.broadcast %cst_60 : f32 to vector<8x1xf32>
    %141 = arith.addf %137, %140 : vector<8x1xf32>
    %142 = math.sqrt %141 : vector<8x1xf32>
    %143 = vector.broadcast %142 : vector<8x1xf32> to vector<8x32xf32>
    %144 = arith.divf %139, %143 : vector<8x32xf32>
    %145 = vector.broadcast %125 : vector<1x32xf32> to vector<8x32xf32>
    %146 = arith.mulf %145, %144 : vector<8x32xf32>
    %147 = vector.broadcast %126 : vector<1x32xf32> to vector<8x32xf32>
    %148 = arith.addf %146, %147 : vector<8x32xf32>
    %c0_61 = arith.constant 0 : index
    %c0_62 = arith.constant 0 : index
    %149 = vector.load %arg11[%c0_61, %c0_62] : memref<32x128xf32, #tpu.memory_space<vmem>>, vector<32x128xf32>
    %cst_63 = arith.constant dense<0.000000e+00> : vector<8x128xf32>
    %150 = tpu.matmul %148, %149, %cst_63 {dimension_numbers = #tpu.dot_dimension_numbers<[1], [0], [0], [1], [0, 0, 1, 1], [], []>} : vector<8x32xf32>, vector<32x128xf32>, vector<8x128xf32> -> vector<8x128xf32>
    %c0_64 = arith.constant 0 : index
    %c0_65 = arith.constant 0 : index
    %151 = vector.load %arg12[%c0_64, %c0_65] : memref<1x128xf32, #tpu.memory_space<vmem>>, vector<1x128xf32>
    %152 = vector.broadcast %151 : vector<1x128xf32> to vector<8x128xf32>
    %153 = arith.addf %150, %152 : vector<8x128xf32>
    %cst_66 = arith.constant 5.000000e-01 : f32
    %154 = vector.broadcast %cst_66 : f32 to vector<8x128xf32>
    %155 = arith.mulf %154, %153 : vector<8x128xf32>
    %156 = arith.mulf %153, %153 : vector<8x128xf32>
    %157 = arith.mulf %156, %153 : vector<8x128xf32>
    %cst_67 = arith.constant 4.471500e-02 : f32
    %158 = vector.broadcast %cst_67 : f32 to vector<8x128xf32>
    %159 = arith.mulf %158, %157 : vector<8x128xf32>
    %160 = arith.addf %153, %159 : vector<8x128xf32>
    %cst_68 = arith.constant 0.797884583 : f32
    %161 = vector.broadcast %cst_68 : f32 to vector<8x128xf32>
    %162 = arith.mulf %161, %160 : vector<8x128xf32>
    %163 = math.tanh %162 : vector<8x128xf32>
    %cst_69 = arith.constant 1.000000e+00 : f32
    %164 = vector.broadcast %cst_69 : f32 to vector<8x128xf32>
    %165 = arith.addf %164, %163 : vector<8x128xf32>
    %166 = arith.mulf %155, %165 : vector<8x128xf32>
    %c0_70 = arith.constant 0 : index
    %c0_71 = arith.constant 0 : index
    %167 = vector.load %arg13[%c0_70, %c0_71] : memref<128x32xf32, #tpu.memory_space<vmem>>, vector<128x32xf32>
    %cst_72 = arith.constant dense<0.000000e+00> : vector<8x32xf32>
    %168 = tpu.matmul %166, %167, %cst_72 {dimension_numbers = #tpu.dot_dimension_numbers<[1], [0], [0], [1], [0, 0, 1, 1], [], []>} : vector<8x128xf32>, vector<128x32xf32>, vector<8x32xf32> -> vector<8x32xf32>
    %c0_73 = arith.constant 0 : index
    %c0_74 = arith.constant 0 : index
    %169 = vector.load %arg14[%c0_73, %c0_74] : memref<1x32xf32, #tpu.memory_space<vmem>>, vector<1x32xf32>
    %170 = vector.broadcast %169 : vector<1x32xf32> to vector<8x32xf32>
    %171 = arith.addf %168, %170 : vector<8x32xf32>
    %172 = arith.addf %124, %171 : vector<8x32xf32>
    %c0_75 = arith.constant 0 : index
    %c0_76 = arith.constant 0 : index
    %c0_77 = arith.constant 0 : index
    %173 = vector.load %arg15[%c0_75, %c0_76, %c0_77] : memref<1x8x32xf32, #tpu.memory_space<vmem>>, vector<1x8x32xf32>
    %174 = vector.shape_cast %173 : vector<1x8x32xf32> to vector<8x32xf32>
    %175 = vector.shape_cast %172 : vector<8x32xf32> to vector<1x8x32xf32>
    tpu.vector_store %arg15[%c0_75, %c0_76, %c0_77], %175 {strides = array<i32>} : memref<1x8x32xf32, #tpu.memory_space<vmem>>, vector<1x8x32xf32>,
    return
  }
  func.func @transform_0(%arg0: i32) -> (i32, i32, i32) {
    %c0_i32 = arith.constant 0 : i32
    %c0_i32_0 = arith.constant 0 : i32
    %c0_i32_1 = arith.constant 0 : i32
    return %arg0, %c0_i32, %c0_i32_0 : i32, i32, i32
  }
  func.func @transform_1(%arg0: i32) -> (i32, i32) {
    %c0_i32 = arith.constant 0 : i32
    %c0_i32_0 = arith.constant 0 : i32
    %c0_i32_1 = arith.constant 0 : i32
    return %c0_i32, %c0_i32_0 : i32, i32
  }
  func.func @transform_2(%arg0: i32) -> (i32, i32) {
    %c0_i32 = arith.constant 0 : i32
    %c0_i32_0 = arith.constant 0 : i32
    %c0_i32_1 = arith.constant 0 : i32
    return %c0_i32, %c0_i32_0 : i32, i32
  }
  func.func @transform_3(%arg0: i32) -> (i32, i32) {
    %c0_i32 = arith.constant 0 : i32
    %c0_i32_0 = arith.constant 0 : i32
    %c0_i32_1 = arith.constant 0 : i32
    return %c0_i32, %c0_i32_0 : i32, i32
  }
  func.func @transform_4(%arg0: i32) -> (i32, i32) {
    %c0_i32 = arith.constant 0 : i32
    %c0_i32_0 = arith.constant 0 : i32
    %c0_i32_1 = arith.constant 0 : i32
    return %c0_i32, %c0_i32_0 : i32, i32
  }
  func.func @transform_5(%arg0: i32) -> (i32, i32) {
    %c0_i32 = arith.constant 0 : i32
    %c0_i32_0 = arith.constant 0 : i32
    %c0_i32_1 = arith.constant 0 : i32
    return %c0_i32, %c0_i32_0 : i32, i32
  }
  func.func @transform_6(%arg0: i32) -> (i32, i32) {
    %c0_i32 = arith.constant 0 : i32
    %c0_i32_0 = arith.constant 0 : i32
    %c0_i32_1 = arith.constant 0 : i32
    return %c0_i32, %c0_i32_0 : i32, i32
  }
  func.func @transform_7(%arg0: i32) -> (i32, i32) {
    %c0_i32 = arith.constant 0 : i32
    %c0_i32_0 = arith.constant 0 : i32
    %c0_i32_1 = arith.constant 0 : i32
    return %c0_i32, %c0_i32_0 : i32, i32
  }
  func.func @transform_8(%arg0: i32) -> (i32, i32) {
    %c0_i32 = arith.constant 0 : i32
    %c0_i32_0 = arith.constant 0 : i32
    %c0_i32_1 = arith.constant 0 : i32
    return %c0_i32, %c0_i32_0 : i32, i32
  }
  func.func @transform_9(%arg0: i32) -> (i32, i32) {
    %c0_i32 = arith.constant 0 : i32
    %c0_i32_0 = arith.constant 0 : i32
    %c0_i32_1 = arith.constant 0 : i32
    return %c0_i32, %c0_i32_0 : i32, i32
  }
  func.func @transform_10(%arg0: i32) -> (i32, i32) {
    %c0_i32 = arith.constant 0 : i32
    %c0_i32_0 = arith.constant 0 : i32
    %c0_i32_1 = arith.constant 0 : i32
    return %c0_i32, %c0_i32_0 : i32, i32
  }
  func.func @transform_11(%arg0: i32) -> (i32, i32) {
    %c0_i32 = arith.constant 0 : i32
    %c0_i32_0 = arith.constant 0 : i32
    %c0_i32_1 = arith.constant 0 : i32
    return %c0_i32, %c0_i32_0 : i32, i32
  }
  func.func @transform_12(%arg0: i32) -> (i32, i32) {
    %c0_i32 = arith.constant 0 : i32
    %c0_i32_0 = arith.constant 0 : i32
    %c0_i32_1 = arith.constant 0 : i32
    return %c0_i32, %c0_i32_0 : i32, i32
  }
  func.func @transform_13(%arg0: i32) -> (i32, i32) {
    %c0_i32 = arith.constant 0 : i32
    %c0_i32_0 = arith.constant 0 : i32
    %c0_i32_1 = arith.constant 0 : i32
    return %c0_i32, %c0_i32_0 : i32, i32
  }
  func.func @transform_14(%arg0: i32) -> (i32, i32, i32) {
    %c0_i32 = arith.constant 0 : i32
    %c0_i32_0 = arith.constant 0 : i32
    %c0_i32_1 = arith.constant 0 : i32
    return %arg0, %c0_i32, %c0_i32_0 : i32, i32, i32
  }
}

</mosaic_0001>

<llo_original>
// kernel: tpu_custom_call.1
$region0: #{tpu_custom_call.1}
  #allocation0 [shape = 'u32[]', space=smem, size = 0x4, offset = 0x4, fixed_abs, tag = 'smem constant byte address 0x4 - core index']
  #allocation1 [shape = 'u32[144,128]{1,0:T(1,128)}', space=vmem, size = 0x12000, scoped, tag = 'internal scratch']
  %s0 = inlined_call_operand.hbm [shape: f32[2,8,32], index: 0, kind: input, shape index: {}]
  %s1 = inlined_call_operand.vmem [shape: f32[1,32], index: 1, kind: input, shape index: {}]
  %s2 = inlined_call_operand.vmem [shape: f32[1,32], index: 2, kind: input, shape index: {}]
  %s3 = inlined_call_operand.vmem [shape: f32[32,32], index: 3, kind: input, shape index: {}]
  %s4 = inlined_call_operand.vmem [shape: f32[32,32], index: 4, kind: input, shape index: {}]
  %s5 = inlined_call_operand.vmem [shape: f32[32,32], index: 5, kind: input, shape index: {}]
  %s6 = inlined_call_operand.vmem [shape: f32[32,32], index: 6, kind: input, shape index: {}]
  %s7 = inlined_call_operand.vmem [shape: f32[1,32], index: 7, kind: input, shape index: {}]
  %s8 = inlined_call_operand.vmem [shape: f32[1,32], index: 8, kind: input, shape index: {}]
  %s9 = inlined_call_operand.vmem [shape: f32[1,32], index: 9, kind: input, shape index: {}]
  %s10 = inlined_call_operand.vmem [shape: f32[32,128], index: 10, kind: input, shape index: {}]
  %s11 = inlined_call_operand.vmem [shape: f32[1,128], index: 11, kind: input, shape index: {}]
  %s12 = inlined_call_operand.vmem [shape: f32[128,32], index: 12, kind: input, shape index: {}]
  %s13 = inlined_call_operand.vmem [shape: f32[1,32], index: 13, kind: input, shape index: {}]
  %s14 = inlined_call_operand.hbm [shape: f32[2,8,32], index: 14, kind: output, shape index: {}]
  %s15 = sld [smem:[#allocation0]]
  $region93: #{tpu_custom_call.1} parent=0
    _
  %s17 = ssub.s32 1, %s15
  %s18 = scalar_select 0, %s17, %s15
  $region1: #{tpu_custom_call.1} parent=0
    #allocation2 [shape = 'u8[8192]{0}', space=vmem, size = 0x2000, scoped, tag = 'input window, operand 0']
    #allocation3 [shape = 's32[2]{0}', space=sflag, size = 0x8, scoped, tag = 'scoped memory for tpu_custom_call.1']
    #allocation4 [shape = 's32[2]{0}', space=sflag, size = 0x8, scoped, tag = 'scoped memory for tpu_custom_call.1']
    #allocation5 [shape = 'u8[8192]{0}', space=vmem, size = 0x2000, scoped, tag = 'output window, operand 0']
    %19 = vsyncpa [#allocation3], 0
    %s20 = scalar_lea.sflag [#allocation3], 1
    %21 = vsyncpa %s20, 0
    %22 = vsyncpa [#allocation4], 0
    %s23 = scalar_lea.sflag [#allocation4], 1
    %24 = vsyncpa %s23, 0
    loop: start=0, step=1, limit=4
    $region2: #{tpu_custom_call.1} parent=1 // loop_pre_header
      _
    $region3: #{tpu_custom_call.1} parent=1 // loop_header
      %s26 = sphi 0, %s30
      %p27 = scmp.ge.s32.totalorder %s26, 4
      %s36 = sphi 0, %s38
      %s39 = sphi 0, %s36
      %s40 = sphi 0, %s39
      %s56 = sphi 0, %s40
      %s60 = sphi 0, %s60
      %s62 = sphi 0, %s60
      %s63 = sphi 0, %s62
      %s77 = sphi 0, %s63
      %s81 = sphi 0, %s81
      %s83 = sphi 0, %s81
      %s84 = sphi 0, %s83
      %s98 = sphi 0, %s84
      %s102 = sphi 0, %s102
      %s104 = sphi 0, %s102
      %s105 = sphi 0, %s104
      %s119 = sphi 0, %s105
      %s123 = sphi 0, %s123
      %s125 = sphi 0, %s123
      %s126 = sphi 0, %s125
      %s140 = sphi 0, %s126
      %s144 = sphi 0, %s144
      %s146 = sphi 0, %s144
      %s147 = sphi 0, %s146
      %s161 = sphi 0, %s147
      %s165 = sphi 0, %s165
      %s167 = sphi 0, %s165
      %s168 = sphi 0, %s167
      %s182 = sphi 0, %s168
      %s186 = sphi 0, %s186
      %s188 = sphi 0, %s186
      %s189 = sphi 0, %s188
      %s203 = sphi 0, %s189
      %s207 = sphi 0, %s207
      %s209 = sphi 0, %s207
      %s210 = sphi 0, %s209
      %s224 = sphi 0, %s210
      %s228 = sphi 0, %s228
      %s230 = sphi 0, %s228
      %s231 = sphi 0, %s230
      %s245 = sphi 0, %s231
      %s249 = sphi 0, %s249
      %s251 = sphi 0, %s249
      %s252 = sphi 0, %s251
      %s266 = sphi 0, %s252
      %s270 = sphi 0, %s270
      %s272 = sphi 0, %s270
      %s273 = sphi 0, %s272
      %s287 = sphi 0, %s273
      %s291 = sphi 0, %s291
      %s293 = sphi 0, %s291
      %s294 = sphi 0, %s293
      %s308 = sphi 0, %s294
      %s312 = sphi 0, %s312
      %s314 = sphi 0, %s312
      %s315 = sphi 0, %s314
      %s329 = sphi 0, %s315
      %s335 = sphi 0, %s337
      %s338 = sphi 0, %s335
      %s339 = sphi 0, %s338
      %s355 = sphi 0, %s339
    $region4: #{tpu_custom_call.1} parent=1 // loop_header_branch
      %29 = sbr.rel (%p27) target = $region8
    $region5: #{tpu_custom_call.1} parent=1 // loop_body
      %s31 = ssub.s32 %s26, 1
      %s32 = ssub.s32 %s26, 2
      %s33 = sadd.s32 %s26, 1
      %s34 = ssub.s32 %s26, %s33
      %p35 = scmp.eq.s32.totalorder %s34, 0
      %s37 = sadd.s32 %s36, 1
      %s38 = scalar_select %p35, %s36, %s37
      %p41 = pneg %p35
      %p42 = scmp.eq.s32.totalorder %s26, 1
      %p43 = por %p41, %p42
      %p44 = scmp.ne.s32.totalorder %s36, %s39
      %p45 = scmp.eq.s32.totalorder %s26, 0
      %p46 = por %p44, %p45
      %p47 = scmp.ne.s32.totalorder %s36, %s39
      %p48 = scmp.eq.s32.totalorder %s31, 1
      %p49 = por %p47, %p48
      %p50 = scmp.ne.s32.totalorder %s39, %s40
      %p51 = scmp.eq.s32.totalorder %s31, 0
      %p52 = por %p50, %p51
      %p53 = scmp.ne.s32.totalorder %s39, %s40
      %p54 = scmp.eq.s32.totalorder %s32, 1
      %p55 = por %p53, %p54
      %p57 = scmp.ne.s32.totalorder %s40, %s56
      %p58 = scmp.eq.s32.totalorder %s32, 0
      %p59 = por %p57, %p58
      %s61 = sadd.s32 %s60, 1
      %p64 = scmp.eq.s32.totalorder %s26, 1
      %p65 = scmp.ne.s32.totalorder %s60, %s62
      %p66 = scmp.eq.s32.totalorder %s26, 0
      %p67 = por %p65, %p66
      %p68 = scmp.ne.s32.totalorder %s60, %s62
      %p69 = scmp.eq.s32.totalorder %s31, 1
      %p70 = por %p68, %p69
      %p71 = scmp.ne.s32.totalorder %s62, %s63
      %p72 = scmp.eq.s32.totalorder %s31, 0
      %p73 = por %p71, %p72
      %p74 = scmp.ne.s32.totalorder %s62, %s63
      %p75 = scmp.eq.s32.totalorder %s32, 1
      %p76 = por %p74, %p75
      %p78 = scmp.ne.s32.totalorder %s63, %s77
      %p79 = scmp.eq.s32.totalorder %s32, 0
      %p80 = por %p78, %p79
      %s82 = sadd.s32 %s81, 1
      %p85 = scmp.eq.s32.totalorder %s26, 1
      %p86 = scmp.ne.s32.totalorder %s81, %s83
      %p87 = scmp.eq.s32.totalorder %s26, 0
      %p88 = por %p86, %p87
      %p89 = scmp.ne.s32.totalorder %s81, %s83
      %p90 = scmp.eq.s32.totalorder %s31, 1
      %p91 = por %p89, %p90
      %p92 = scmp.ne.s32.totalorder %s83, %s84
      %p93 = scmp.eq.s32.totalorder %s31, 0
      %p94 = por %p92, %p93
      %p95 = scmp.ne.s32.totalorder %s83, %s84
      %p96 = scmp.eq.s32.totalorder %s32, 1
      %p97 = por %p95, %p96
      %p99 = scmp.ne.s32.totalorder %s84, %s98
      %p100 = scmp.eq.s32.totalorder %s32, 0
      %p101 = por %p99, %p100
      %s103 = sadd.s32 %s102, 1
      %p106 = scmp.eq.s32.totalorder %s26, 1
      %p107 = scmp.ne.s32.totalorder %s102, %s104
      %p108 = scmp.eq.s32.totalorder %s26, 0
      %p109 = por %p107, %p108
      %p110 = scmp.ne.s32.totalorder %s102, %s104
      %p111 = scmp.eq.s32.totalorder %s31, 1
      %p112 = por %p110, %p111
      %p113 = scmp.ne.s32.totalorder %s104, %s105
      %p114 = scmp.eq.s32.totalorder %s31, 0
      %p115 = por %p113, %p114
      %p116 = scmp.ne.s32.totalorder %s104, %s105
      %p117 = scmp.eq.s32.totalorder %s32, 1
      %p118 = por %p116, %p117
      %p120 = scmp.ne.s32.totalorder %s105, %s119
      %p121 = scmp.eq.s32.totalorder %s32, 0
      %p122 = por %p120, %p121
      %s124 = sadd.s32 %s123, 1
      %p127 = scmp.eq.s32.totalorder %s26, 1
      %p128 = scmp.ne.s32.totalorder %s123, %s125
      %p129 = scmp.eq.s32.totalorder %s26, 0
      %p130 = por %p128, %p129
      %p131 = scmp.ne.s32.totalorder %s123, %s125
      %p132 = scmp.eq.s32.totalorder %s31, 1
      %p133 = por %p131, %p132
      %p134 = scmp.ne.s32.totalorder %s125, %s126
      %p135 = scmp.eq.s32.totalorder %s31, 0
      %p136 = por %p134, %p135
      %p137 = scmp.ne.s32.totalorder %s125, %s126
      %p138 = scmp.eq.s32.totalorder %s32, 1
      %p139 = por %p137, %p138
      %p141 = scmp.ne.s32.totalorder %s126, %s140
      %p142 = scmp.eq.s32.totalorder %s32, 0
      %p143 = por %p141, %p142
      %s145 = sadd.s32 %s144, 1
      %p148 = scmp.eq.s32.totalorder %s26, 1
      %p149 = scmp.ne.s32.totalorder %s144, %s146
      %p150 = scmp.eq.s32.totalorder %s26, 0
      %p151 = por %p149, %p150
      %p152 = scmp.ne.s32.totalorder %s144, %s146
      %p153 = scmp.eq.s32.totalorder %s31, 1
      %p154 = por %p152, %p153
      %p155 = scmp.ne.s32.totalorder %s146, %s147
      %p156 = scmp.eq.s32.totalorder %s31, 0
      %p157 = por %p155, %p156
      %p158 = scmp.ne.s32.totalorder %s146, %s147
      %p159 = scmp.eq.s32.totalorder %s32, 1
      %p160 = por %p158, %p159
      %p162 = scmp.ne.s32.totalorder %s147, %s161
      %p163 = scmp.eq.s32.totalorder %s32, 0
      %p164 = por %p162, %p163
      %s166 = sadd.s32 %s165, 1
      %p169 = scmp.eq.s32.totalorder %s26, 1
      %p170 = scmp.ne.s32.totalorder %s165, %s167
      %p171 = scmp.eq.s32.totalorder %s26, 0
      %p172 = por %p170, %p171
      %p173 = scmp.ne.s32.totalorder %s165, %s167
      %p174 = scmp.eq.s32.totalorder %s31, 1
      %p175 = por %p173, %p174
      %p176 = scmp.ne.s32.totalorder %s167, %s168
      %p177 = scmp.eq.s32.totalorder %s31, 0
      %p178 = por %p176, %p177
      %p179 = scmp.ne.s32.totalorder %s167, %s168
      %p180 = scmp.eq.s32.totalorder %s32, 1
      %p181 = por %p179, %p180
      %p183 = scmp.ne.s32.totalorder %s168, %s182
      %p184 = scmp.eq.s32.totalorder %s32, 0
      %p185 = por %p183, %p184
      %s187 = sadd.s32 %s186, 1
      %p190 = scmp.eq.s32.totalorder %s26, 1
      %p191 = scmp.ne.s32.totalorder %s186, %s188
      %p192 = scmp.eq.s32.totalorder %s26, 0
      %p193 = por %p191, %p192
      %p194 = scmp.ne.s32.totalorder %s186, %s188
      %p195 = scmp.eq.s32.totalorder %s31, 1
      %p196 = por %p194, %p195
      %p197 = scmp.ne.s32.totalorder %s188, %s189
      %p198 = scmp.eq.s32.totalorder %s31, 0
      %p199 = por %p197, %p198
      %p200 = scmp.ne.s32.totalorder %s188, %s189
      %p201 = scmp.eq.s32.totalorder %s32, 1
      %p202 = por %p200, %p201
      %p204 = scmp.ne.s32.totalorder %s189, %s203
      %p205 = scmp.eq.s32.totalorder %s32, 0
      %p206 = por %p204, %p205
      %s208 = sadd.s32 %s207, 1
      %p211 = scmp.eq.s32.totalorder %s26, 1
      %p212 = scmp.ne.s32.totalorder %s207, %s209
      %p213 = scmp.eq.s32.totalorder %s26, 0
      %p214 = por %p212, %p213
      %p215 = scmp.ne.s32.totalorder %s207, %s209
      %p216 = scmp.eq.s32.totalorder %s31, 1
      %p217 = por %p215, %p216
      %p218 = scmp.ne.s32.totalorder %s209, %s210
      %p219 = scmp.eq.s32.totalorder %s31, 0
      %p220 = por %p218, %p219
      %p221 = scmp.ne.s32.totalorder %s209, %s210
      %p222 = scmp.eq.s32.totalorder %s32, 1
      %p223 = por %p221, %p222
      %p225 = scmp.ne.s32.totalorder %s210, %s224
      %p226 = scmp.eq.s32.totalorder %s32, 0
      %p227 = por %p225, %p226
      %s229 = sadd.s32 %s228, 1
      %p232 = scmp.eq.s32.totalorder %s26, 1
      %p233 = scmp.ne.s32.totalorder %s228, %s230
      %p234 = scmp.eq.s32.totalorder %s26, 0
      %p235 = por %p233, %p234
      %p236 = scmp.ne.s32.totalorder %s228, %s230
      %p237 = scmp.eq.s32.totalorder %s31, 1
      %p238 = por %p236, %p237
      %p239 = scmp.ne.s32.totalorder %s230, %s231
      %p240 = scmp.eq.s32.totalorder %s31, 0
      %p241 = por %p239, %p240
      %p242 = scmp.ne.s32.totalorder %s230, %s231
      %p243 = scmp.eq.s32.totalorder %s32, 1
      %p244 = por %p242, %p243
      %p246 = scmp.ne.s32.totalorder %s231, %s245
      %p247 = scmp.eq.s32.totalorder %s32, 0
      %p248 = por %p246, %p247
      %s250 = sadd.s32 %s249, 1
      %p253 = scmp.eq.s32.totalorder %s26, 1
      %p254 = scmp.ne.s32.totalorder %s249, %s251
      %p255 = scmp.eq.s32.totalorder %s26, 0
      %p256 = por %p254, %p255
      %p257 = scmp.ne.s32.totalorder %s249, %s251
      %p258 = scmp.eq.s32.totalorder %s31, 1
      %p259 = por %p257, %p258
      %p260 = scmp.ne.s32.totalorder %s251, %s252
      %p261 = scmp.eq.s32.totalorder %s31, 0
      %p262 = por %p260, %p261
      %p263 = scmp.ne.s32.totalorder %s251, %s252
      %p264 = scmp.eq.s32.totalorder %s32, 1
      %p265 = por %p263, %p264
      %p267 = scmp.ne.s32.totalorder %s252, %s266
      %p268 = scmp.eq.s32.totalorder %s32, 0
      %p269 = por %p267, %p268
      %s271 = sadd.s32 %s270, 1
      %p274 = scmp.eq.s32.totalorder %s26, 1
      %p275 = scmp.ne.s32.totalorder %s270, %s272
      %p276 = scmp.eq.s32.totalorder %s26, 0
      %p277 = por %p275, %p276
      %p278 = scmp.ne.s32.totalorder %s270, %s272
      %p279 = scmp.eq.s32.totalorder %s31, 1
      %p280 = por %p278, %p279
      %p281 = scmp.ne.s32.totalorder %s272, %s273
      %p282 = scmp.eq.s32.totalorder %s31, 0
      %p283 = por %p281, %p282
      %p284 = scmp.ne.s32.totalorder %s272, %s273
      %p285 = scmp.eq.s32.totalorder %s32, 1
      %p286 = por %p284, %p285
      %p288 = scmp.ne.s32.totalorder %s273, %s287
      %p289 = scmp.eq.s32.totalorder %s32, 0
      %p290 = por %p288, %p289
      %s292 = sadd.s32 %s291, 1
      %p295 = scmp.eq.s32.totalorder %s26, 1
      %p296 = scmp.ne.s32.totalorder %s291, %s293
      %p297 = scmp.eq.s32.totalorder %s26, 0
      %p298 = por %p296, %p297
      %p299 = scmp.ne.s32.totalorder %s291, %s293
      %p300 = scmp.eq.s32.totalorder %s31, 1
      %p301 = por %p299, %p300
      %p302 = scmp.ne.s32.totalorder %s293, %s294
      %p303 = scmp.eq.s32.totalorder %s31, 0
      %p304 = por %p302, %p303
      %p305 = scmp.ne.s32.totalorder %s293, %s294
      %p306 = scmp.eq.s32.totalorder %s32, 1
      %p307 = por %p305, %p306
      %p309 = scmp.ne.s32.totalorder %s294, %s308
      %p310 = scmp.eq.s32.totalorder %s32, 0
      %p311 = por %p309, %p310
      %s313 = sadd.s32 %s312, 1
      %p316 = scmp.eq.s32.totalorder %s26, 1
      %p317 = scmp.ne.s32.totalorder %s312, %s314
      %p318 = scmp.eq.s32.totalorder %s26, 0
      %p319 = por %p317, %p318
      %p320 = scmp.ne.s32.totalorder %s312, %s314
      %p321 = scmp.eq.s32.totalorder %s31, 1
      %p322 = por %p320, %p321
      %p323 = scmp.ne.s32.totalorder %s314, %s315
      %p324 = scmp.eq.s32.totalorder %s31, 0
      %p325 = por %p323, %p324
      %p326 = scmp.ne.s32.totalorder %s314, %s315
      %p327 = scmp.eq.s32.totalorder %s32, 1
      %p328 = por %p326, %p327
      %p330 = scmp.ne.s32.totalorder %s315, %s329
      %p331 = scmp.eq.s32.totalorder %s32, 0
      %p332 = por %p330, %p331
      %s333 = ssub.s32 %s26, %s33
      %p334 = scmp.eq.s32.totalorder %s333, 0
      %s336 = sadd.s32 %s335, 1
      %s337 = scalar_select %p334, %s335, %s336
      %p340 = pneg %p334
      %p341 = scmp.eq.s32.totalorder %s26, 1
      %p342 = por %p340, %p341
      %p343 = scmp.ne.s32.totalorder %s335, %s338
      %p344 = scmp.eq.s32.totalorder %s26, 0
      %p345 = por %p343, %p344
      %p346 = scmp.ne.s32.totalorder %s335, %s338
      %p347 = scmp.eq.s32.totalorder %s31, 1
      %p348 = por %p346, %p347
      %p349 = scmp.ne.s32.totalorder %s338, %s339
      %p350 = scmp.eq.s32.totalorder %s31, 0
      %p351 = por %p349, %p350
      %p352 = scmp.ne.s32.totalorder %s338, %s339
      %p353 = scmp.eq.s32.totalorder %s32, 1
      %p354 = por %p352, %p353
      %p356 = scmp.ne.s32.totalorder %s339, %s355
      %p357 = scmp.eq.s32.totalorder %s32, 0
      %p358 = por %p356, %p357
      %p359 = scmp.le.s32.totalorder 1, %s26
      %p360 = scmp.lt.s32.totalorder %s26, 3
      %p361 = pnand %p359, %p360
      %p362 = pneg %p361
      // Predicated region
      $region9: #{tpu_custom_call.1} parent=5 // pred_check
        _
      $region10: #{tpu_custom_call.1} parent=5 // pred_check_branch
        %364 = sbr.rel (%p361) target = $region12
      $region11: #{tpu_custom_call.1} parent=5 // pred_region
        %s365 = ssub.s32 %s26, 1
        // Predicated region
        $region13: #{tpu_custom_call.1} parent=11 // pred_check
          %p366 = pneg %p73
        $region14: #{tpu_custom_call.1} parent=11 // pred_check_branch
          %368 = sbr.rel (%p366) target = $region16
        $region15: #{tpu_custom_call.1} parent=11 // pred_region
          _
        $region16: #{tpu_custom_call.1} parent=11 // pred_fallthru
          _
        // Predicated region
        $region17: #{tpu_custom_call.1} parent=11 // pred_check
          %p369 = pneg %p94
        $region18: #{tpu_custom_call.1} parent=11 // pred_check_branch
          %371 = sbr.rel (%p369) target = $region20
        $region19: #{tpu_custom_call.1} parent=11 // pred_region
          _
        $region20: #{tpu_custom_call.1} parent=11 // pred_fallthru
          _
        // Predicated region
        $region21: #{tpu_custom_call.1} parent=11 // pred_check
          %p372 = pneg %p115
        $region22: #{tpu_custom_call.1} parent=11 // pred_check_branch
          %374 = sbr.rel (%p372) target = $region24
        $region23: #{tpu_custom_call.1} parent=11 // pred_region
          _
        $region24: #{tpu_custom_call.1} parent=11 // pred_fallthru
          _
        // Predicated region
        $region25: #{tpu_custom_call.1} parent=11 // pred_check
          %p375 = pneg %p136
        $region26: #{tpu_custom_call.1} parent=11 // pred_check_branch
          %377 = sbr.rel (%p375) target = $region28
        $region27: #{tpu_custom_call.1} parent=11 // pred_region
          _
        $region28: #{tpu_custom_call.1} parent=11 // pred_fallthru
          _
        // Predicated region
        $region29: #{tpu_custom_call.1} parent=11 // pred_check
          %p378 = pneg %p157
        $region30: #{tpu_custom_call.1} parent=11 // pred_check_branch
          %380 = sbr.rel (%p378) target = $region32
        $region31: #{tpu_custom_call.1} parent=11 // pred_region
          _
        $region32: #{tpu_custom_call.1} parent=11 // pred_fallthru
          _
        // Predicated region
        $region33: #{tpu_custom_call.1} parent=11 // pred_check
          %p381 = pneg %p178
        $region34: #{tpu_custom_call.1} parent=11 // pred_check_branch
          %383 = sbr.rel (%p381) target = $region36
        $region35: #{tpu_custom_call.1} parent=11 // pred_region
          _
        $region36: #{tpu_custom_call.1} parent=11 // pred_fallthru
          _
        // Predicated region
        $region37: #{tpu_custom_call.1} parent=11 // pred_check
          %p384 = pneg %p199
        $region38: #{tpu_custom_call.1} parent=11 // pred_check_branch
          %386 = sbr.rel (%p384) target = $region40
        $region39: #{tpu_custom_call.1} parent=11 // pred_region
          _
        $region40: #{tpu_custom_call.1} parent=11 // pred_fallthru
          _
        // Predicated region
        $region41: #{tpu_custom_call.1} parent=11 // pred_check
          %p387 = pneg %p220
        $region42: #{tpu_custom_call.1} parent=11 // pred_check_branch
          %389 = sbr.rel (%p387) target = $region44
        $region43: #{tpu_custom_call.1} parent=11 // pred_region
          _
        $region44: #{tpu_custom_call.1} parent=11 // pred_fallthru
          _
        // Predicated region
        $region45: #{tpu_custom_call.1} parent=11 // pred_check
          %p390 = pneg %p241
        $region46: #{tpu_custom_call.1} parent=11 // pred_check_branch
          %392 = sbr.rel (%p390) target = $region48
        $region47: #{tpu_custom_call.1} parent=11 // pred_region
          _
        $region48: #{tpu_custom_call.1} parent=11 // pred_fallthru
          _
        // Predicated region
        $region49: #{tpu_custom_call.1} parent=11 // pred_check
          %p393 = pneg %p262
        $region50: #{tpu_custom_call.1} parent=11 // pred_check_branch
          %395 = sbr.rel (%p393) target = $region52
        $region51: #{tpu_custom_call.1} parent=11 // pred_region
          _
        $region52: #{tpu_custom_call.1} parent=11 // pred_fallthru
          _
        // Predicated region
        $region53: #{tpu_custom_call.1} parent=11 // pred_check
          %p396 = pneg %p283
        $region54: #{tpu_custom_call.1} parent=11 // pred_check_branch
          %398 = sbr.rel (%p396) target = $region56
        $region55: #{tpu_custom_call.1} parent=11 // pred_region
          _
        $region56: #{tpu_custom_call.1} parent=11 // pred_fallthru
          _
        // Predicated region
        $region57: #{tpu_custom_call.1} parent=11 // pred_check
          %p399 = pneg %p304
        $region58: #{tpu_custom_call.1} parent=11 // pred_check_branch
          %401 = sbr.rel (%p399) target = $region60
        $region59: #{tpu_custom_call.1} parent=11 // pred_region
          _
        $region60: #{tpu_custom_call.1} parent=11 // pred_fallthru
          _
        // Predicated region
        $region61: #{tpu_custom_call.1} parent=11 // pred_check
          %p402 = pneg %p325
        $region62: #{tpu_custom_call.1} parent=11 // pred_check_branch
          %404 = sbr.rel (%p402) target = $region64
        $region63: #{tpu_custom_call.1} parent=11 // pred_region
          _
        $region64: #{tpu_custom_call.1} parent=11 // pred_fallthru
          _
      $region12: #{tpu_custom_call.1} parent=5 // pred_fallthru
        _
      %p405 = scmp.lt.s32.totalorder %s26, 2
      // Predicated region
      $region65: #{tpu_custom_call.1} parent=5 // pred_check
        %p406 = pneg %p405
      $region66: #{tpu_custom_call.1} parent=5 // pred_check_branch
        %408 = sbr.rel (%p406) target = $region68
      $region67: #{tpu_custom_call.1} parent=5 // pred_region
        // Predicated region
        $region69: #{tpu_custom_call.1} parent=67 // pred_check
          %p409 = pneg %p46
        $region70: #{tpu_custom_call.1} parent=67 // pred_check_branch
          %411 = sbr.rel (%p409) target = $region72
        $region71: #{tpu_custom_call.1} parent=67 // pred_region
          %s412 = sand.u32 %s36, 1
          %s413 = scalar_lea.sflag [#allocation3], %s412
          %s414 = sand.u32 %s36, 1
          %s415 = smul.addr %s414, 8
          %s416 = scalar_lea.vmem [#allocation2], %s415
          %s418 = ssub.s32 128, 128
          %419 = vsyncadd %s413, %s418
          %s420 = smul.addr %s26, 128
          %s421 = scalar_lea.hbm %s0, %s420
          %s423 = sshll.u32 %s416, 4
          %s424 = int_to_ptr.vmem [resolvable:$true] %s423
          %426 = dma.hbm_to_vmem [thread:$0]  %s421, 128, %s424, %s413
        $region72: #{tpu_custom_call.1} parent=67 // pred_fallthru
          _
      $region68: #{tpu_custom_call.1} parent=5 // pred_fallthru
        _
      %p427 = scmp.le.s32.totalorder 1, %s26
      %p428 = scmp.lt.s32.totalorder %s26, 3
      %p429 = pnand %p427, %p428
      %p430 = pneg %p429
      // Predicated region
      $region73: #{tpu_custom_call.1} parent=5 // pred_check
        _
      $region74: #{tpu_custom_call.1} parent=5 // pred_check_branch
        %432 = sbr.rel (%p429) target = $region76
      $region75: #{tpu_custom_call.1} parent=5 // pred_region
        %s433 = ssub.s32 %s26, 1
        %s434 = sand.u32 %s39, 1
        %s435 = scalar_lea.sflag [#allocation3], %s434
        %s436 = sand.u32 %s39, 1
        %s437 = smul.addr %s436, 8
        %s438 = scalar_lea.vmem [#allocation2], %s437
        // Predicated region
        $region77: #{tpu_custom_call.1} parent=75 // pred_check
          %p439 = pneg %p52
        $region78: #{tpu_custom_call.1} parent=75 // pred_check_branch
          %441 = sbr.rel (%p439) target = $region80
        $region79: #{tpu_custom_call.1} parent=75 // pred_region
          %442 = dma.done %s435, 128
        $region80: #{tpu_custom_call.1} parent=75 // pred_fallthru
          _
        %s443 = sand.u32 %s39, 1
        %s444 = scalar_lea.sflag [#allocation3], %s443
        %s445 = sand.u32 %s39, 1
        %s446 = smul.addr %s445, 8
        %s447 = scalar_lea.vmem [#allocation2], %s446
        %p448 = pneg %p52
        %p449 = pneg %p49
        %p450 = pneg %p73
        %p451 = pneg %p70
        %p452 = pneg %p94
        %p453 = pneg %p91
        %p454 = pneg %p115
        %p455 = pneg %p112
        %p456 = pneg %p136
        %p457 = pneg %p133
        %p458 = pneg %p157
        %p459 = pneg %p154
        %p460 = pneg %p178
        %p461 = pneg %p175
        %p462 = pneg %p199
        %p463 = pneg %p196
        %p464 = pneg %p220
        %p465 = pneg %p217
        %p466 = pneg %p241
        %p467 = pneg %p238
        %p468 = pneg %p262
        %p469 = pneg %p259
        %p470 = pneg %p283
        %p471 = pneg %p280
        %p472 = pneg %p304
        %p473 = pneg %p301
        %p474 = pneg %p325
        %p475 = pneg %p322
        %p476 = pneg %p351
        %p477 = pneg %p348
        %s478 = sand.u32 %s338, 1
        %s479 = scalar_lea.sflag [#allocation4], %s478
        %s480 = sand.u32 %s338, 1
        %s481 = smul.addr %s480, 8
        %s482 = scalar_lea.vmem [#allocation5], %s481
        %v483 = vld [vmem:[%s438] sm:$0xff]
        %v484 = vld [vmem:[%s1] sm:$0x1]
        %v485 = vld [vmem:[%s2] sm:$0x1]
        %vm486 = vcmask 261120
        %v487 = vsel %vm486, %v483, 0.0
        %488 = vadd.xlane.f32.xlu0 %v487
        %v489 = vpop.xlane.xlu0 %488
        %v490 = vrcp.pop 32.0
        %v491 = vmul.f32 %v489, %v490
        %v492 = vsub.f32 %v483, %v491
        %v493 = vmul.f32 %v492, %v492
        %v494 = vsel %vm486, %v493, 0.0
        %495 = vadd.xlane.f32.xlu0 %v494
        %v496 = vpop.xlane.xlu0 %495
        %v497 = vmul.f32 %v496, %v490
        %v498 = vadd.f32 %v497, 1e-05
        %v499 = vrsqrt.pop %v498
        %v500 = vmul.f32 %v498, %v499
        %vm501 = vcmp.eq.f32.partialorder %v498, inf
        %v502 = vsel %vm501, %v498, %v500
        %vm503 = vcmp.eq.f32.partialorder %v498, 0.0
        %v504 = vand.u32 %v498, 2147483648
        %v505 = vsel %vm503, %v504, %v502
        %v506 = vrcp.pop %v505
        %v507 = vmul.f32 %v492, %v506
        %v509 = vlaneseq
        %v510 = vshrl.u32 %v509, 7
        %v511 = vsub.s32 0, %v510
        %v512 = vrot.slane %v484, %v511
        %v514 = vmul.f32 %v512, %v507
        %v516 = vlaneseq
        %v517 = vshrl.u32 %v516, 7
        %v518 = vsub.s32 0, %v517
        %v519 = vrot.slane %v485, %v518
        %v521 = vadd.f32 %v514, %v519
        %v522 = vld [vmem:[%s3] sm:$0xff]
        %v523 = vld [vmem:[%s3 + $0x8] sm:$0xff]
        %v524 = vld [vmem:[%s3 + $0x10] sm:$0xff]
        %v525 = vld [vmem:[%s3 + $0x18] sm:$0xff]
        %v527 = vsel %vm486, %v521, 0
        %529 = vmatprep.subr.mxu0 0.0
        %530 = vmatpush1.msra.mxu0 0.0
        %531 = vmatprep.subr.mxu0 0.0
        %532 = vmatpush1.msra.mxu0 0.0
        %533 = vmatprep.subr.mxu0 0.0
        %534 = vmatpush1.msra.mxu0 0.0
        %535 = vmatprep.subr.mxu0 0.0
        %536 = vmatpush1.msra.mxu0 0.0
        %537 = vmatprep.subr.mxu0 0.0
        %538 = vmatpush1.msra.mxu0 0.0
        %539 = vmatprep.subr.mxu0 0.0
        %540 = vmatpush1.msra.mxu0 0.0
        %541 = vmatprep.subr.mxu0 0.0
        %542 = vmatpush1.msra.mxu0 0.0
        %543 = vmatprep.subr.mxu0 0.0
        %544 = vmatpush1.msra.mxu0 0.0
        %545 = vmatprep.subr.mxu0 0.0
        %546 = vmatpush1.msra.mxu0 0.0
        %547 = vmatprep.subr.mxu0 0.0
        %548 = vmatpush1.msra.mxu0 0.0
        %549 = vmatprep.subr.mxu0 0.0
        %550 = vmatpush1.msra.mxu0 0.0
        %551 = vmatprep.subr.mxu0 0.0
        %552 = vmatpush1.msra.mxu0 0.0
        %553 = vmatprep.subr.mxu0 0.0
        %554 = vmatpush1.msra.mxu0 %v525
        %555 = vmatprep.subr.mxu0 0.0
        %556 = vmatpush1.msra.mxu0 %v524
        %557 = vmatprep.subr.mxu0 0.0
        %558 = vmatpush1.msra.mxu0 %v523
        %559 = vmatprep.subr.mxu0 0.0
        %560 = vmatpush1.msra.mxu0 %v522
        %561 = vmatprep.subr.mxu0 0.0
        %562 = vmatpush2.msra.mxu0 0.0
        %563 = vmatprep.subr.mxu0 0.0
        %564 = vmatpush2.msra.mxu0 0.0
        %565 = vmatprep.subr.mxu0 0.0
        %566 = vmatpush2.msra.mxu0 0.0
        %567 = vmatprep.subr.mxu0 0.0
        %568 = vmatpush2.msra.mxu0 0.0
        %569 = vmatprep.subr.mxu0 0.0
        %570 = vmatpush2.msra.mxu0 0.0
        %571 = vmatprep.subr.mxu0 0.0
        %572 = vmatpush2.msra.mxu0 0.0
        %573 = vmatprep.subr.mxu0 0.0
        %574 = vmatpush2.msra.mxu0 0.0
        %575 = vmatprep.subr.mxu0 0.0
        %576 = vmatpush2.msra.mxu0 0.0
        %577 = vmatprep.subr.mxu0 0.0
        %578 = vmatpush2.msra.mxu0 0.0
        %579 = vmatprep.subr.mxu0 0.0
        %580 = vmatpush2.msra.mxu0 0.0
        %581 = vmatprep.subr.mxu0 0.0
        %582 = vmatpush2.msra.mxu0 0.0
        %583 = vmatprep.subr.mxu0 0.0
        %584 = vmatpush2.msra.mxu0 0.0
        %585 = vmatprep.subr.mxu0 0.0
        %586 = vmatpush2.msra.mxu0 0.0
        %587 = vmatprep.subr.mxu0 0.0
        %588 = vmatpush2.msra.mxu0 0.0
        %589 = vmatprep.subr.mxu0 0.0
        %590 = vmatpush2.msra.mxu0 0.0
        %591 = vmatprep.subr.mxu0 0.0
        %592 = vmatpush2.msra.mxu0 0.0
        %593 = vmatprep.mubr.f32.mxu0 0.0
        %594 = vmatmul.mubr.f32.gmra.mxu0 %v527
        %v595 = vpop.f32.mrf.mxu0
        %v596 = vadd.f32 0.0, %v595
        %v597 = vpop.f32.mrf.mxu0
        %598 = vdwg.mxu0
        %v599 = vld [vmem:[%s4] sm:$0xff]
        %v600 = vld [vmem:[%s4 + $0x8] sm:$0xff]
        %v601 = vld [vmem:[%s4 + $0x10] sm:$0xff]
        %v602 = vld [vmem:[%s4 + $0x18] sm:$0xff]
        %603 = vmatprep.subr.mxu0 0.0
        %604 = vmatpush1.msra.mxu0 0.0
        %605 = vmatprep.subr.mxu0 0.0
        %606 = vmatpush1.msra.mxu0 0.0
        %607 = vmatprep.subr.mxu0 0.0
        %608 = vmatpush1.msra.mxu0 0.0
        %609 = vmatprep.subr.mxu0 0.0
        %610 = vmatpush1.msra.mxu0 0.0
        %611 = vmatprep.subr.mxu0 0.0
        %612 = vmatpush1.msra.mxu0 0.0
        %613 = vmatprep.subr.mxu0 0.0
        %614 = vmatpush1.msra.mxu0 0.0
        %615 = vmatprep.subr.mxu0 0.0
        %616 = vmatpush1.msra.mxu0 0.0
        %617 = vmatprep.subr.mxu0 0.0
        %618 = vmatpush1.msra.mxu0 0.0
        %619 = vmatprep.subr.mxu0 0.0
        %620 = vmatpush1.msra.mxu0 0.0
        %621 = vmatprep.subr.mxu0 0.0
        %622 = vmatpush1.msra.mxu0 0.0
        %623 = vmatprep.subr.mxu0 0.0
        %624 = vmatpush1.msra.mxu0 0.0
        %625 = vmatprep.subr.mxu0 0.0
        %626 = vmatpush1.msra.mxu0 0.0
        %627 = vmatprep.subr.mxu0 0.0
        %628 = vmatpush1.msra.mxu0 %v602
        %629 = vmatprep.subr.mxu0 0.0
        %630 = vmatpush1.msra.mxu0 %v601
        %631 = vmatprep.subr.mxu0 0.0
        %632 = vmatpush1.msra.mxu0 %v600
        %633 = vmatprep.subr.mxu0 0.0
        %634 = vmatpush1.msra.mxu0 %v599
        %635 = vmatprep.subr.mxu0 0.0
        %636 = vmatpush2.msra.mxu0 0.0
        %637 = vmatprep.subr.mxu0 0.0
        %638 = vmatpush2.msra.mxu0 0.0
        %639 = vmatprep.subr.mxu0 0.0
        %640 = vmatpush2.msra.mxu0 0.0
        %641 = vmatprep.subr.mxu0 0.0
        %642 = vmatpush2.msra.mxu0 0.0
        %643 = vmatprep.subr.mxu0 0.0
        %644 = vmatpush2.msra.mxu0 0.0
        %645 = vmatprep.subr.mxu0 0.0
        %646 = vmatpush2.msra.mxu0 0.0
        %647 = vmatprep.subr.mxu0 0.0
        %648 = vmatpush2.msra.mxu0 0.0
        %649 = vmatprep.subr.mxu0 0.0
        %650 = vmatpush2.msra.mxu0 0.0
        %651 = vmatprep.subr.mxu0 0.0
        %652 = vmatpush2.msra.mxu0 0.0
        %653 = vmatprep.subr.mxu0 0.0
        %654 = vmatpush2.msra.mxu0 0.0
        %655 = vmatprep.subr.mxu0 0.0
        %656 = vmatpush2.msra.mxu0 0.0
        %657 = vmatprep.subr.mxu0 0.0
        %658 = vmatpush2.msra.mxu0 0.0
        %659 = vmatprep.subr.mxu0 0.0
        %660 = vmatpush2.msra.mxu0 0.0
        %661 = vmatprep.subr.mxu0 0.0
        %662 = vmatpush2.msra.mxu0 0.0
        %663 = vmatprep.subr.mxu0 0.0
        %664 = vmatpush2.msra.mxu0 0.0
        %665 = vmatprep.subr.mxu0 0.0
        %666 = vmatpush2.msra.mxu0 0.0
        %667 = vmatprep.mubr.f32.mxu0 0.0
        %668 = vmatmul.mubr.f32.gmra.mxu0 %v527
        %v669 = vpop.f32.mrf.mxu0
        %v670 = vadd.f32 0.0, %v669
        %v671 = vpop.f32.mrf.mxu0
        %672 = vdwg.mxu0
        %v673 = vld [vmem:[%s5] sm:$0xff]
        %v674 = vld [vmem:[%s5 + $0x8] sm:$0xff]
        %v675 = vld [vmem:[%s5 + $0x10] sm:$0xff]
        %v676 = vld [vmem:[%s5 + $0x18] sm:$0xff]
        %677 = vmatprep.subr.mxu0 0.0
        %678 = vmatpush1.msra.mxu0 0.0
        %679 = vmatprep.subr.mxu0 0.0
        %680 = vmatpush1.msra.mxu0 0.0
        %681 = vmatprep.subr.mxu0 0.0
        %682 = vmatpush1.msra.mxu0 0.0
        %683 = vmatprep.subr.mxu0 0.0
        %684 = vmatpush1.msra.mxu0 0.0
        %685 = vmatprep.subr.mxu0 0.0
        %686 = vmatpush1.msra.mxu0 0.0
        %687 = vmatprep.subr.mxu0 0.0
        %688 = vmatpush1.msra.mxu0 0.0
        %689 = vmatprep.subr.mxu0 0.0
        %690 = vmatpush1.msra.mxu0 0.0
        %691 = vmatprep.subr.mxu0 0.0
        %692 = vmatpush1.msra.mxu0 0.0
        %693 = vmatprep.subr.mxu0 0.0
        %694 = vmatpush1.msra.mxu0 0.0
        %695 = vmatprep.subr.mxu0 0.0
        %696 = vmatpush1.msra.mxu0 0.0
        %697 = vmatprep.subr.mxu0 0.0
        %698 = vmatpush1.msra.mxu0 0.0
        %699 = vmatprep.subr.mxu0 0.0
        %700 = vmatpush1.msra.mxu0 0.0
        %701 = vmatprep.subr.mxu0 0.0
        %702 = vmatpush1.msra.mxu0 %v676
        %703 = vmatprep.subr.mxu0 0.0
        %704 = vmatpush1.msra.mxu0 %v675
        %705 = vmatprep.subr.mxu0 0.0
        %706 = vmatpush1.msra.mxu0 %v674
        %707 = vmatprep.subr.mxu0 0.0
        %708 = vmatpush1.msra.mxu0 %v673
        %709 = vmatprep.subr.mxu0 0.0
        %710 = vmatpush2.msra.mxu0 0.0
        %711 = vmatprep.subr.mxu0 0.0
        %712 = vmatpush2.msra.mxu0 0.0
        %713 = vmatprep.subr.mxu0 0.0
        %714 = vmatpush2.msra.mxu0 0.0
        %715 = vmatprep.subr.mxu0 0.0
        %716 = vmatpush2.msra.mxu0 0.0
        %717 = vmatprep.subr.mxu0 0.0
        %718 = vmatpush2.msra.mxu0 0.0
        %719 = vmatprep.subr.mxu0 0.0
        %720 = vmatpush2.msra.mxu0 0.0
        %721 = vmatprep.subr.mxu0 0.0
        %722 = vmatpush2.msra.mxu0 0.0
        %723 = vmatprep.subr.mxu0 0.0
        %724 = vmatpush2.msra.mxu0 0.0
        %725 = vmatprep.subr.mxu0 0.0
        %726 = vmatpush2.msra.mxu0 0.0
        %727 = vmatprep.subr.mxu0 0.0
        %728 = vmatpush2.msra.mxu0 0.0
        %729 = vmatprep.subr.mxu0 0.0
        %730 = vmatpush2.msra.mxu0 0.0
        %731 = vmatprep.subr.mxu0 0.0
        %732 = vmatpush2.msra.mxu0 0.0
        %733 = vmatprep.subr.mxu0 0.0
        %734 = vmatpush2.msra.mxu0 0.0
        %735 = vmatprep.subr.mxu0 0.0
        %736 = vmatpush2.msra.mxu0 0.0
        %737 = vmatprep.subr.mxu0 0.0
        %738 = vmatpush2.msra.mxu0 0.0
        %739 = vmatprep.subr.mxu0 0.0
        %740 = vmatpush2.msra.mxu0 0.0
        %741 = vmatprep.mubr.f32.mxu0 0.0
        %742 = vmatmul.mubr.f32.gmra.mxu0 %v527
        %v743 = vpop.f32.mrf.mxu0
        %v744 = vadd.f32 0.0, %v743
        %v745 = vpop.f32.mrf.mxu0
        %746 = vdwg.mxu0
        %v747 = vld [vmem:[%s6] sm:$0xff]
        %v748 = vld [vmem:[%s6 + $0x8] sm:$0xff]
        %v749 = vld [vmem:[%s6 + $0x10] sm:$0xff]
        %v750 = vld [vmem:[%s6 + $0x18] sm:$0xff]
        %v751 = vlaneseq
        %v752 = vshrl.u32 %v751, 7
        %v753 = vlaneseq
        %v754 = vand.u32 %v753, 127
        %vm755 = vcmp.le.s32.totalorder %v754, %v752
        %vm756 = vcmask 64512
        %v758 = vsel %vm756, %v596, 0
        %v761 = vsel %vm756, %v670, 0
        %763 = vmatprep.subr.mxu0 0.0
        %764 = vmatpush1.xpose.msra.mxu0 0.0
        %765 = vmatprep.subr.mxu0 0.0
        %766 = vmatpush1.xpose.msra.mxu0 0.0
        %767 = vmatprep.subr.mxu0 0.0
        %768 = vmatpush1.xpose.msra.mxu0 0.0
        %769 = vmatprep.subr.mxu0 0.0
        %770 = vmatpush1.xpose.msra.mxu0 0.0
        %771 = vmatprep.subr.mxu0 0.0
        %772 = vmatpush1.xpose.msra.mxu0 0.0
        %773 = vmatprep.subr.mxu0 0.0
        %774 = vmatpush1.xpose.msra.mxu0 0.0
        %775 = vmatprep.subr.mxu0 0.0
        %776 = vmatpush1.xpose.msra.mxu0 0.0
        %777 = vmatprep.subr.mxu0 0.0
        %778 = vmatpush1.xpose.msra.mxu0 0.0
        %779 = vmatprep.subr.mxu0 0.0
        %780 = vmatpush1.xpose.msra.mxu0 0.0
        %781 = vmatprep.subr.mxu0 0.0
        %782 = vmatpush1.xpose.msra.mxu0 0.0
        %783 = vmatprep.subr.mxu0 0.0
        %784 = vmatpush1.xpose.msra.mxu0 0.0
        %785 = vmatprep.subr.mxu0 0.0
        %786 = vmatpush1.xpose.msra.mxu0 0.0
        %787 = vmatprep.subr.mxu0 0.0
        %788 = vmatpush1.xpose.msra.mxu0 0.0
        %789 = vmatprep.subr.mxu0 0.0
        %790 = vmatpush1.xpose.msra.mxu0 0.0
        %791 = vmatprep.subr.mxu0 0.0
        %792 = vmatpush1.xpose.msra.mxu0 0.0
        %793 = vmatprep.subr.mxu0 0.0
        %794 = vmatpush1.xpose.msra.mxu0 %v761
        %795 = vmatprep.subr.mxu0 0.0
        %796 = vmatpush2.xpose.msra.mxu0 0.0
        %797 = vmatprep.subr.mxu0 0.0
        %798 = vmatpush2.xpose.msra.mxu0 0.0
        %799 = vmatprep.subr.mxu0 0.0
        %800 = vmatpush2.xpose.msra.mxu0 0.0
        %801 = vmatprep.subr.mxu0 0.0
        %802 = vmatpush2.xpose.msra.mxu0 0.0
        %803 = vmatprep.subr.mxu0 0.0
        %804 = vmatpush2.xpose.msra.mxu0 0.0
        %805 = vmatprep.subr.mxu0 0.0
        %806 = vmatpush2.xpose.msra.mxu0 0.0
        %807 = vmatprep.subr.mxu0 0.0
        %808 = vmatpush2.xpose.msra.mxu0 0.0
        %809 = vmatprep.subr.mxu0 0.0
        %810 = vmatpush2.xpose.msra.mxu0 0.0
        %811 = vmatprep.subr.mxu0 0.0
        %812 = vmatpush2.xpose.msra.mxu0 0.0
        %813 = vmatprep.subr.mxu0 0.0
        %814 = vmatpush2.xpose.msra.mxu0 0.0
        %815 = vmatprep.subr.mxu0 0.0
        %816 = vmatpush2.xpose.msra.mxu0 0.0
        %817 = vmatprep.subr.mxu0 0.0
        %818 = vmatpush2.xpose.msra.mxu0 0.0
        %819 = vmatprep.subr.mxu0 0.0
        %820 = vmatpush2.xpose.msra.mxu0 0.0
        %821 = vmatprep.subr.mxu0 0.0
        %822 = vmatpush2.xpose.msra.mxu0 0.0
        %823 = vmatprep.subr.mxu0 0.0
        %824 = vmatpush2.xpose.msra.mxu0 0.0
        %825 = vmatprep.subr.mxu0 0.0
        %826 = vmatpush2.xpose.msra.mxu0 0.0
        %827 = vmatprep.mubr.f32.mxu0 0.0
        %828 = vmatmul.mubr.f32.gmra.mxu0 %v758
        %v829 = vpop.f32.mrf.mxu0
        %v830 = vadd.f32 0.0, %v829
        %v831 = vpop.f32.mrf.mxu0
        %832 = vdwg.mxu0
        %v833 = vmul.f32 %v830, 0.35355338
        %v834 = vsel %vm755, %v833, -1e+30
        %v835 = vsel %vm756, %v834, -inf
        %836 = vmax.xlane.f32.xlu0 %v835
        %v837 = vpop.xlane.xlu0 %836
        %v838 = vsub.f32 %v834, %v837
        %v839 = vmul.f32 %v838, 1.442695
        %v840 = vpow.pop %v839
        %v841 = vsel %vm756, %v840, 0.0
        %842 = vadd.xlane.f32.xlu0 %v841
        %v843 = vpop.xlane.xlu0 %842
        %v844 = vrcp.pop %v843
        %v845 = vmul.f32 %v840, %v844
        %v847 = vsel %vm756, %v845, 0
        %849 = vmatprep.subr.mxu0 0.0
        %850 = vmatpush1.msra.mxu0 0.0
        %851 = vmatprep.subr.mxu0 0.0
        %852 = vmatpush1.msra.mxu0 0.0
        %853 = vmatprep.subr.mxu0 0.0
        %854 = vmatpush1.msra.mxu0 0.0
        %855 = vmatprep.subr.mxu0 0.0
        %856 = vmatpush1.msra.mxu0 0.0
        %857 = vmatprep.subr.mxu0 0.0
        %858 = vmatpush1.msra.mxu0 0.0
        %859 = vmatprep.subr.mxu0 0.0
        %860 = vmatpush1.msra.mxu0 0.0
        %861 = vmatprep.subr.mxu0 0.0
        %862 = vmatpush1.msra.mxu0 0.0
        %863 = vmatprep.subr.mxu0 0.0
        %864 = vmatpush1.msra.mxu0 0.0
        %865 = vmatprep.subr.mxu0 0.0
        %866 = vmatpush1.msra.mxu0 0.0
        %867 = vmatprep.subr.mxu0 0.0
        %868 = vmatpush1.msra.mxu0 0.0
        %869 = vmatprep.subr.mxu0 0.0
        %870 = vmatpush1.msra.mxu0 0.0
        %871 = vmatprep.subr.mxu0 0.0
        %872 = vmatpush1.msra.mxu0 0.0
        %873 = vmatprep.subr.mxu0 0.0
        %874 = vmatpush1.msra.mxu0 0.0
        %875 = vmatprep.subr.mxu0 0.0
        %876 = vmatpush1.msra.mxu0 0.0
        %877 = vmatprep.subr.mxu0 0.0
        %878 = vmatpush1.msra.mxu0 0.0
        %879 = vmatprep.subr.mxu0 0.0
        %880 = vmatpush1.msra.mxu0 %v744
        %881 = vmatprep.subr.mxu0 0.0
        %882 = vmatpush2.msra.mxu0 0.0
        %883 = vmatprep.subr.mxu0 0.0
        %884 = vmatpush2.msra.mxu0 0.0
        %885 = vmatprep.subr.mxu0 0.0
        %886 = vmatpush2.msra.mxu0 0.0
        %887 = vmatprep.subr.mxu0 0.0
        %888 = vmatpush2.msra.mxu0 0.0
        %889 = vmatprep.subr.mxu0 0.0
        %890 = vmatpush2.msra.mxu0 0.0
        %891 = vmatprep.subr.mxu0 0.0
        %892 = vmatpush2.msra.mxu0 0.0
        %893 = vmatprep.subr.mxu0 0.0
        %894 = vmatpush2.msra.mxu0 0.0
        %895 = vmatprep.subr.mxu0 0.0
        %896 = vmatpush2.msra.mxu0 0.0
        %897 = vmatprep.subr.mxu0 0.0
        %898 = vmatpush2.msra.mxu0 0.0
        %899 = vmatprep.subr.mxu0 0.0
        %900 = vmatpush2.msra.mxu0 0.0
        %901 = vmatprep.subr.mxu0 0.0
        %902 = vmatpush2.msra.mxu0 0.0
        %903 = vmatprep.subr.mxu0 0.0
        %904 = vmatpush2.msra.mxu0 0.0
        %905 = vmatprep.subr.mxu0 0.0
        %906 = vmatpush2.msra.mxu0 0.0
        %907 = vmatprep.subr.mxu0 0.0
        %908 = vmatpush2.msra.mxu0 0.0
        %909 = vmatprep.subr.mxu0 0.0
        %910 = vmatpush2.msra.mxu0 0.0
        %911 = vmatprep.subr.mxu0 0.0
        %912 = vmatpush2.msra.mxu0 0.0
        %913 = vmatprep.mubr.f32.mxu0 0.0
        %914 = vmatmul.mubr.f32.gmra.mxu0 %v847
        %v915 = vpop.f32.mrf.mxu0
        %v916 = vadd.f32 0.0, %v915
        %v917 = vpop.f32.mrf.mxu0
        %918 = vdwg.mxu0
        %919 = vrot.lane.b32.xlu0 %v596, 120
        %v920 = vpop.permute.xlu0 %919
        %921 = vrot.lane.b32.xlu0 %v670, 120
        %v922 = vpop.permute.xlu0 %921
        %v923 = vsel %vm756, %v920, 0
        %v925 = vsel %vm756, %v922, 0
        %927 = vmatprep.subr.mxu0 0.0
        %928 = vmatpush1.xpose.msra.mxu0 0.0
        %929 = vmatprep.subr.mxu0 0.0
        %930 = vmatpush1.xpose.msra.mxu0 0.0
        %931 = vmatprep.subr.mxu0 0.0
        %932 = vmatpush1.xpose.msra.mxu0 0.0
        %933 = vmatprep.subr.mxu0 0.0
        %934 = vmatpush1.xpose.msra.mxu0 0.0
        %935 = vmatprep.subr.mxu0 0.0
        %936 = vmatpush1.xpose.msra.mxu0 0.0
        %937 = vmatprep.subr.mxu0 0.0
        %938 = vmatpush1.xpose.msra.mxu0 0.0
        %939 = vmatprep.subr.mxu0 0.0
        %940 = vmatpush1.xpose.msra.mxu0 0.0
        %941 = vmatprep.subr.mxu0 0.0
        %942 = vmatpush1.xpose.msra.mxu0 0.0
        %943 = vmatprep.subr.mxu0 0.0
        %944 = vmatpush1.xpose.msra.mxu0 0.0
        %945 = vmatprep.subr.mxu0 0.0
        %946 = vmatpush1.xpose.msra.mxu0 0.0
        %947 = vmatprep.subr.mxu0 0.0
        %948 = vmatpush1.xpose.msra.mxu0 0.0
        %949 = vmatprep.subr.mxu0 0.0
        %950 = vmatpush1.xpose.msra.mxu0 0.0
        %951 = vmatprep.subr.mxu0 0.0
        %952 = vmatpush1.xpose.msra.mxu0 0.0
        %953 = vmatprep.subr.mxu0 0.0
        %954 = vmatpush1.xpose.msra.mxu0 0.0
        %955 = vmatprep.subr.mxu0 0.0
        %956 = vmatpush1.xpose.msra.mxu0 0.0
        %957 = vmatprep.subr.mxu0 0.0
        %958 = vmatpush1.xpose.msra.mxu0 %v925
        %959 = vmatprep.subr.mxu0 0.0
        %960 = vmatpush2.xpose.msra.mxu0 0.0
        %961 = vmatprep.subr.mxu0 0.0
        %962 = vmatpush2.xpose.msra.mxu0 0.0
        %963 = vmatprep.subr.mxu0 0.0
        %964 = vmatpush2.xpose.msra.mxu0 0.0
        %965 = vmatprep.subr.mxu0 0.0
        %966 = vmatpush2.xpose.msra.mxu0 0.0
        %967 = vmatprep.subr.mxu0 0.0
        %968 = vmatpush2.xpose.msra.mxu0 0.0
        %969 = vmatprep.subr.mxu0 0.0
        %970 = vmatpush2.xpose.msra.mxu0 0.0
        %971 = vmatprep.subr.mxu0 0.0
        %972 = vmatpush2.xpose.msra.mxu0 0.0
        %973 = vmatprep.subr.mxu0 0.0
        %974 = vmatpush2.xpose.msra.mxu0 0.0
        %975 = vmatprep.subr.mxu0 0.0
        %976 = vmatpush2.xpose.msra.mxu0 0.0
        %977 = vmatprep.subr.mxu0 0.0
        %978 = vmatpush2.xpose.msra.mxu0 0.0
        %979 = vmatprep.subr.mxu0 0.0
        %980 = vmatpush2.xpose.msra.mxu0 0.0
        %981 = vmatprep.subr.mxu0 0.0
        %982 = vmatpush2.xpose.msra.mxu0 0.0
        %983 = vmatprep.subr.mxu0 0.0
        %984 = vmatpush2.xpose.msra.mxu0 0.0
        %985 = vmatprep.subr.mxu0 0.0
        %986 = vmatpush2.xpose.msra.mxu0 0.0
        %987 = vmatprep.subr.mxu0 0.0
        %988 = vmatpush2.xpose.msra.mxu0 0.0
        %989 = vmatprep.subr.mxu0 0.0
        %990 = vmatpush2.xpose.msra.mxu0 0.0
        %991 = vmatprep.mubr.f32.mxu0 0.0
        %992 = vmatmul.mubr.f32.gmra.mxu0 %v923
        %v993 = vpop.f32.mrf.mxu0
        %v994 = vadd.f32 0.0, %v993
        %v995 = vpop.f32.mrf.mxu0
        %996 = vdwg.mxu0
        %v997 = vmul.f32 %v994, 0.35355338
        %v998 = vsel %vm755, %v997, -1e+30
        %v999 = vsel %vm756, %v998, -inf
        %1000 = vmax.xlane.f32.xlu0 %v999
        %v1001 = vpop.xlane.xlu0 %1000
        %v1002 = vsub.f32 %v998, %v1001
        %v1003 = vmul.f32 %v1002, 1.442695
        %v1004 = vpow.pop %v1003
        %v1005 = vsel %vm756, %v1004, 0.0
        %1006 = vadd.xlane.f32.xlu0 %v1005
        %v1007 = vpop.xlane.xlu0 %1006
        %v1008 = vrcp.pop %v1007
        %v1009 = vmul.f32 %v1004, %v1008
        %1011 = vrot.lane.b32.xlu0 %v744, 120
        %v1012 = vpop.permute.xlu0 %1011
        %v1015 = vsel %vm756, %v1009, 0
        %1017 = vmatprep.subr.mxu0 0.0
        %1018 = vmatpush1.msra.mxu0 0.0
        %1019 = vmatprep.subr.mxu0 0.0
        %1020 = vmatpush1.msra.mxu0 0.0
        %1021 = vmatprep.subr.mxu0 0.0
        %1022 = vmatpush1.msra.mxu0 0.0
        %1023 = vmatprep.subr.mxu0 0.0
        %1024 = vmatpush1.msra.mxu0 0.0
        %1025 = vmatprep.subr.mxu0 0.0
        %1026 = vmatpush1.msra.mxu0 0.0
        %1027 = vmatprep.subr.mxu0 0.0
        %1028 = vmatpush1.msra.mxu0 0.0
        %1029 = vmatprep.subr.mxu0 0.0
        %1030 = vmatpush1.msra.mxu0 0.0
        %1031 = vmatprep.subr.mxu0 0.0
        %1032 = vmatpush1.msra.mxu0 0.0
        %1033 = vmatprep.subr.mxu0 0.0
        %1034 = vmatpush1.msra.mxu0 0.0
        %1035 = vmatprep.subr.mxu0 0.0
        %1036 = vmatpush1.msra.mxu0 0.0
        %1037 = vmatprep.subr.mxu0 0.0
        %1038 = vmatpush1.msra.mxu0 0.0
        %1039 = vmatprep.subr.mxu0 0.0
        %1040 = vmatpush1.msra.mxu0 0.0
        %1041 = vmatprep.subr.mxu0 0.0
        %1042 = vmatpush1.msra.mxu0 0.0
        %1043 = vmatprep.subr.mxu0 0.0
        %1044 = vmatpush1.msra.mxu0 0.0
        %1045 = vmatprep.subr.mxu0 0.0
        %1046 = vmatpush1.msra.mxu0 0.0
        %1047 = vmatprep.subr.mxu0 0.0
        %1048 = vmatpush1.msra.mxu0 %v1012
        %1049 = vmatprep.subr.mxu0 0.0
        %1050 = vmatpush2.msra.mxu0 0.0
        %1051 = vmatprep.subr.mxu0 0.0
        %1052 = vmatpush2.msra.mxu0 0.0
        %1053 = vmatprep.subr.mxu0 0.0
        %1054 = vmatpush2.msra.mxu0 0.0
        %1055 = vmatprep.subr.mxu0 0.0
        %1056 = vmatpush2.msra.mxu0 0.0
        %1057 = vmatprep.subr.mxu0 0.0
        %1058 = vmatpush2.msra.mxu0 0.0
        %1059 = vmatprep.subr.mxu0 0.0
        %1060 = vmatpush2.msra.mxu0 0.0
        %1061 = vmatprep.subr.mxu0 0.0
        %1062 = vmatpush2.msra.mxu0 0.0
        %1063 = vmatprep.subr.mxu0 0.0
        %1064 = vmatpush2.msra.mxu0 0.0
        %1065 = vmatprep.subr.mxu0 0.0
        %1066 = vmatpush2.msra.mxu0 0.0
        %1067 = vmatprep.subr.mxu0 0.0
        %1068 = vmatpush2.msra.mxu0 0.0
        %1069 = vmatprep.subr.mxu0 0.0
        %1070 = vmatpush2.msra.mxu0 0.0
        %1071 = vmatprep.subr.mxu0 0.0
        %1072 = vmatpush2.msra.mxu0 0.0
        %1073 = vmatprep.subr.mxu0 0.0
        %1074 = vmatpush2.msra.mxu0 0.0
        %1075 = vmatprep.subr.mxu0 0.0
        %1076 = vmatpush2.msra.mxu0 0.0
        %1077 = vmatprep.subr.mxu0 0.0
        %1078 = vmatpush2.msra.mxu0 0.0
        %1079 = vmatprep.subr.mxu0 0.0
        %1080 = vmatpush2.msra.mxu0 0.0
        %1081 = vmatprep.mubr.f32.mxu0 0.0
        %1082 = vmatmul.mubr.f32.gmra.mxu0 %v1015
        %v1083 = vpop.f32.mrf.mxu0
        %v1084 = vadd.f32 0.0, %v1083
        %v1085 = vpop.f32.mrf.mxu0
        %1086 = vdwg.mxu0
        %v1088 = vsel %vm756, %v1084, 0
        %1090 = vmatprep.subr.mxu0 0.0
        %1091 = vmatpush1.msra.mxu0 0.0
        %1092 = vmatprep.subr.mxu0 0.0
        %1093 = vmatpush1.msra.mxu0 0.0
        %1094 = vmatprep.subr.mxu0 0.0
        %1095 = vmatpush1.msra.mxu0 0.0
        %1096 = vmatprep.subr.mxu0 0.0
        %1097 = vmatpush1.msra.mxu0 0.0
        %1098 = vmatprep.subr.mxu0 0.0
        %1099 = vmatpush1.msra.mxu0 0.0
        %1100 = vmatprep.subr.mxu0 0.0
        %1101 = vmatpush1.msra.mxu0 0.0
        %1102 = vmatprep.subr.mxu0 0.0
        %1103 = vmatpush1.msra.mxu0 0.0
        %1104 = vmatprep.subr.mxu0 0.0
        %1105 = vmatpush1.msra.mxu0 0.0
        %1106 = vmatprep.subr.mxu0 0.0
        %1107 = vmatpush1.msra.mxu0 0.0
        %1108 = vmatprep.subr.mxu0 0.0
        %1109 = vmatpush1.msra.mxu0 0.0
        %1110 = vmatprep.subr.mxu0 0.0
        %1111 = vmatpush1.msra.mxu0 0.0
        %1112 = vmatprep.subr.mxu0 0.0
        %1113 = vmatpush1.msra.mxu0 0.0
        %1114 = vmatprep.subr.mxu0 0.0
        %1115 = vmatpush1.msra.mxu0 0.0
        %1116 = vmatprep.subr.mxu0 0.0
        %1117 = vmatpush1.msra.mxu0 0.0
        %1118 = vmatprep.subr.mxu0 0.0
        %1119 = vmatpush1.msra.mxu0 0.0
        %1120 = vmatprep.subr.mxu0 0.0
        %1121 = vmatpush1.msra.mxu0 %v748
        %1122 = vmatprep.subr.mxu0 0.0
        %1123 = vmatpush2.msra.mxu0 0.0
        %1124 = vmatprep.subr.mxu0 0.0
        %1125 = vmatpush2.msra.mxu0 0.0
        %1126 = vmatprep.subr.mxu0 0.0
        %1127 = vmatpush2.msra.mxu0 0.0
        %1128 = vmatprep.subr.mxu0 0.0
        %1129 = vmatpush2.msra.mxu0 0.0
        %1130 = vmatprep.subr.mxu0 0.0
        %1131 = vmatpush2.msra.mxu0 0.0
        %1132 = vmatprep.subr.mxu0 0.0
        %1133 = vmatpush2.msra.mxu0 0.0
        %1134 = vmatprep.subr.mxu0 0.0
        %1135 = vmatpush2.msra.mxu0 0.0
        %1136 = vmatprep.subr.mxu0 0.0
        %1137 = vmatpush2.msra.mxu0 0.0
        %1138 = vmatprep.subr.mxu0 0.0
        %1139 = vmatpush2.msra.mxu0 0.0
        %1140 = vmatprep.subr.mxu0 0.0
        %1141 = vmatpush2.msra.mxu0 0.0
        %1142 = vmatprep.subr.mxu0 0.0
        %1143 = vmatpush2.msra.mxu0 0.0
        %1144 = vmatprep.subr.mxu0 0.0
        %1145 = vmatpush2.msra.mxu0 0.0
        %1146 = vmatprep.subr.mxu0 0.0
        %1147 = vmatpush2.msra.mxu0 0.0
        %1148 = vmatprep.subr.mxu0 0.0
        %1149 = vmatpush2.msra.mxu0 0.0
        %1150 = vmatprep.subr.mxu0 0.0
        %1151 = vmatpush2.msra.mxu0 0.0
        %1152 = vmatprep.subr.mxu0 0.0
        %1153 = vmatpush2.msra.mxu0 0.0
        %1154 = vmatprep.mubr.f32.mxu0 0.0
        %1155 = vmatmul.mubr.f32.gmra.mxu0 %v1088
        %v1156 = vpop.f32.mrf.mxu0
        %v1157 = vadd.f32 0.0, %v1156
        %v1158 = vpop.f32.mrf.mxu0
        %1159 = vdwg.mxu0
        %v1161 = vsel %vm756, %v916, 0
        %1163 = vmatprep.subr.mxu0 0.0
        %1164 = vmatpush1.msra.mxu0 0.0
        %1165 = vmatprep.subr.mxu0 0.0
        %1166 = vmatpush1.msra.mxu0 0.0
        %1167 = vmatprep.subr.mxu0 0.0
        %1168 = vmatpush1.msra.mxu0 0.0
        %1169 = vmatprep.subr.mxu0 0.0
        %1170 = vmatpush1.msra.mxu0 0.0
        %1171 = vmatprep.subr.mxu0 0.0
        %1172 = vmatpush1.msra.mxu0 0.0
        %1173 = vmatprep.subr.mxu0 0.0
        %1174 = vmatpush1.msra.mxu0 0.0
        %1175 = vmatprep.subr.mxu0 0.0
        %1176 = vmatpush1.msra.mxu0 0.0
        %1177 = vmatprep.subr.mxu0 0.0
        %1178 = vmatpush1.msra.mxu0 0.0
        %1179 = vmatprep.subr.mxu0 0.0
        %1180 = vmatpush1.msra.mxu0 0.0
        %1181 = vmatprep.subr.mxu0 0.0
        %1182 = vmatpush1.msra.mxu0 0.0
        %1183 = vmatprep.subr.mxu0 0.0
        %1184 = vmatpush1.msra.mxu0 0.0
        %1185 = vmatprep.subr.mxu0 0.0
        %1186 = vmatpush1.msra.mxu0 0.0
        %1187 = vmatprep.subr.mxu0 0.0
        %1188 = vmatpush1.msra.mxu0 0.0
        %1189 = vmatprep.subr.mxu0 0.0
        %1190 = vmatpush1.msra.mxu0 0.0
        %1191 = vmatprep.subr.mxu0 0.0
        %1192 = vmatpush1.msra.mxu0 0.0
        %1193 = vmatprep.subr.mxu0 0.0
        %1194 = vmatpush1.msra.mxu0 %v747
        %1195 = vmatprep.subr.mxu0 0.0
        %1196 = vmatpush2.msra.mxu0 0.0
        %1197 = vmatprep.subr.mxu0 0.0
        %1198 = vmatpush2.msra.mxu0 0.0
        %1199 = vmatprep.subr.mxu0 0.0
        %1200 = vmatpush2.msra.mxu0 0.0
        %1201 = vmatprep.subr.mxu0 0.0
        %1202 = vmatpush2.msra.mxu0 0.0
        %1203 = vmatprep.subr.mxu0 0.0
        %1204 = vmatpush2.msra.mxu0 0.0
        %1205 = vmatprep.subr.mxu0 0.0
        %1206 = vmatpush2.msra.mxu0 0.0
        %1207 = vmatprep.subr.mxu0 0.0
        %1208 = vmatpush2.msra.mxu0 0.0
        %1209 = vmatprep.subr.mxu0 0.0
        %1210 = vmatpush2.msra.mxu0 0.0
        %1211 = vmatprep.subr.mxu0 0.0
        %1212 = vmatpush2.msra.mxu0 0.0
        %1213 = vmatprep.subr.mxu0 0.0
        %1214 = vmatpush2.msra.mxu0 0.0
        %1215 = vmatprep.subr.mxu0 0.0
        %1216 = vmatpush2.msra.mxu0 0.0
        %1217 = vmatprep.subr.mxu0 0.0
        %1218 = vmatpush2.msra.mxu0 0.0
        %1219 = vmatprep.subr.mxu0 0.0
        %1220 = vmatpush2.msra.mxu0 0.0
        %1221 = vmatprep.subr.mxu0 0.0
        %1222 = vmatpush2.msra.mxu0 0.0
        %1223 = vmatprep.subr.mxu0 0.0
        %1224 = vmatpush2.msra.mxu0 0.0
        %1225 = vmatprep.subr.mxu0 0.0
        %1226 = vmatpush2.msra.mxu0 0.0
        %1227 = vmatprep.mubr.f32.mxu0 0.0
        %1228 = vmatmul.mubr.f32.gmra.mxu0 %v1161
        %v1229 = vpop.f32.mrf.mxu0
        %v1230 = vadd.f32 %v1157, %v1229
        %v1231 = vpop.f32.mrf.mxu0
        %1232 = vdwg.mxu0
        %1233 = vrot.lane.b32.xlu0 %v596, 112
        %v1234 = vpop.permute.xlu0 %1233
        %1235 = vrot.lane.b32.xlu0 %v670, 112
        %v1236 = vpop.permute.xlu0 %1235
        %v1237 = vsel %vm756, %v1234, 0
        %v1239 = vsel %vm756, %v1236, 0
        %1241 = vmatprep.subr.mxu0 0.0
        %1242 = vmatpush1.xpose.msra.mxu0 0.0
        %1243 = vmatprep.subr.mxu0 0.0
        %1244 = vmatpush1.xpose.msra.mxu0 0.0
        %1245 = vmatprep.subr.mxu0 0.0
        %1246 = vmatpush1.xpose.msra.mxu0 0.0
        %1247 = vmatprep.subr.mxu0 0.0
        %1248 = vmatpush1.xpose.msra.mxu0 0.0
        %1249 = vmatprep.subr.mxu0 0.0
        %1250 = vmatpush1.xpose.msra.mxu0 0.0
        %1251 = vmatprep.subr.mxu0 0.0
        %1252 = vmatpush1.xpose.msra.mxu0 0.0
        %1253 = vmatprep.subr.mxu0 0.0
        %1254 = vmatpush1.xpose.msra.mxu0 0.0
        %1255 = vmatprep.subr.mxu0 0.0
        %1256 = vmatpush1.xpose.msra.mxu0 0.0
        %1257 = vmatprep.subr.mxu0 0.0
        %1258 = vmatpush1.xpose.msra.mxu0 0.0
        %1259 = vmatprep.subr.mxu0 0.0
        %1260 = vmatpush1.xpose.msra.mxu0 0.0
        %1261 = vmatprep.subr.mxu0 0.0
        %1262 = vmatpush1.xpose.msra.mxu0 0.0
        %1263 = vmatprep.subr.mxu0 0.0
        %1264 = vmatpush1.xpose.msra.mxu0 0.0
        %1265 = vmatprep.subr.mxu0 0.0
        %1266 = vmatpush1.xpose.msra.mxu0 0.0
        %1267 = vmatprep.subr.mxu0 0.0
        %1268 = vmatpush1.xpose.msra.mxu0 0.0
        %1269 = vmatprep.subr.mxu0 0.0
        %1270 = vmatpush1.xpose.msra.mxu0 0.0
        %1271 = vmatprep.subr.mxu0 0.0
        %1272 = vmatpush1.xpose.msra.mxu0 %v1239
        %1273 = vmatprep.subr.mxu0 0.0
        %1274 = vmatpush2.xpose.msra.mxu0 0.0
        %1275 = vmatprep.subr.mxu0 0.0
        %1276 = vmatpush2.xpose.msra.mxu0 0.0
        %1277 = vmatprep.subr.mxu0 0.0
        %1278 = vmatpush2.xpose.msra.mxu0 0.0
        %1279 = vmatprep.subr.mxu0 0.0
        %1280 = vmatpush2.xpose.msra.mxu0 0.0
        %1281 = vmatprep.subr.mxu0 0.0
        %1282 = vmatpush2.xpose.msra.mxu0 0.0
        %1283 = vmatprep.subr.mxu0 0.0
        %1284 = vmatpush2.xpose.msra.mxu0 0.0
        %1285 = vmatprep.subr.mxu0 0.0
        %1286 = vmatpush2.xpose.msra.mxu0 0.0
        %1287 = vmatprep.subr.mxu0 0.0
        %1288 = vmatpush2.xpose.msra.mxu0 0.0
        %1289 = vmatprep.subr.mxu0 0.0
        %1290 = vmatpush2.xpose.msra.mxu0 0.0
        %1291 = vmatprep.subr.mxu0 0.0
        %1292 = vmatpush2.xpose.msra.mxu0 0.0
        %1293 = vmatprep.subr.mxu0 0.0
        %1294 = vmatpush2.xpose.msra.mxu0 0.0
        %1295 = vmatprep.subr.mxu0 0.0
        %1296 = vmatpush2.xpose.msra.mxu0 0.0
        %1297 = vmatprep.subr.mxu0 0.0
        %1298 = vmatpush2.xpose.msra.mxu0 0.0
        %1299 = vmatprep.subr.mxu0 0.0
        %1300 = vmatpush2.xpose.msra.mxu0 0.0
        %1301 = vmatprep.subr.mxu0 0.0
        %1302 = vmatpush2.xpose.msra.mxu0 0.0
        %1303 = vmatprep.subr.mxu0 0.0
        %1304 = vmatpush2.xpose.msra.mxu0 0.0
        %1305 = vmatprep.mubr.f32.mxu0 0.0
        %1306 = vmatmul.mubr.f32.gmra.mxu0 %v1237
        %v1307 = vpop.f32.mrf.mxu0
        %v1308 = vadd.f32 0.0, %v1307
        %v1309 = vpop.f32.mrf.mxu0
        %1310 = vdwg.mxu0
        %v1311 = vmul.f32 %v1308, 0.35355338
        %v1312 = vsel %vm755, %v1311, -1e+30
        %v1313 = vsel %vm756, %v1312, -inf
        %1314 = vmax.xlane.f32.xlu0 %v1313
        %v1315 = vpop.xlane.xlu0 %1314
        %v1316 = vsub.f32 %v1312, %v1315
        %v1317 = vmul.f32 %v1316, 1.442695
        %v1318 = vpow.pop %v1317
        %v1319 = vsel %vm756, %v1318, 0.0
        %1320 = vadd.xlane.f32.xlu0 %v1319
        %v1321 = vpop.xlane.xlu0 %1320
        %v1322 = vrcp.pop %v1321
        %v1323 = vmul.f32 %v1318, %v1322
        %1324 = vrot.lane.b32.xlu0 %v744, 112
        %v1325 = vpop.permute.xlu0 %1324
        %v1328 = vsel %vm756, %v1323, 0
        %1330 = vmatprep.subr.mxu0 0.0
        %1331 = vmatpush1.msra.mxu0 0.0
        %1332 = vmatprep.subr.mxu0 0.0
        %1333 = vmatpush1.msra.mxu0 0.0
        %1334 = vmatprep.subr.mxu0 0.0
        %1335 = vmatpush1.msra.mxu0 0.0
        %1336 = vmatprep.subr.mxu0 0.0
        %1337 = vmatpush1.msra.mxu0 0.0
        %1338 = vmatprep.subr.mxu0 0.0
        %1339 = vmatpush1.msra.mxu0 0.0
        %1340 = vmatprep.subr.mxu0 0.0
        %1341 = vmatpush1.msra.mxu0 0.0
        %1342 = vmatprep.subr.mxu0 0.0
        %1343 = vmatpush1.msra.mxu0 0.0
        %1344 = vmatprep.subr.mxu0 0.0
        %1345 = vmatpush1.msra.mxu0 0.0
        %1346 = vmatprep.subr.mxu0 0.0
        %1347 = vmatpush1.msra.mxu0 0.0
        %1348 = vmatprep.subr.mxu0 0.0
        %1349 = vmatpush1.msra.mxu0 0.0
        %1350 = vmatprep.subr.mxu0 0.0
        %1351 = vmatpush1.msra.mxu0 0.0
        %1352 = vmatprep.subr.mxu0 0.0
        %1353 = vmatpush1.msra.mxu0 0.0
        %1354 = vmatprep.subr.mxu0 0.0
        %1355 = vmatpush1.msra.mxu0 0.0
        %1356 = vmatprep.subr.mxu0 0.0
        %1357 = vmatpush1.msra.mxu0 0.0
        %1358 = vmatprep.subr.mxu0 0.0
        %1359 = vmatpush1.msra.mxu0 0.0
        %1360 = vmatprep.subr.mxu0 0.0
        %1361 = vmatpush1.msra.mxu0 %v1325
        %1362 = vmatprep.subr.mxu0 0.0
        %1363 = vmatpush2.msra.mxu0 0.0
        %1364 = vmatprep.subr.mxu0 0.0
        %1365 = vmatpush2.msra.mxu0 0.0
        %1366 = vmatprep.subr.mxu0 0.0
        %1367 = vmatpush2.msra.mxu0 0.0
        %1368 = vmatprep.subr.mxu0 0.0
        %1369 = vmatpush2.msra.mxu0 0.0
        %1370 = vmatprep.subr.mxu0 0.0
        %1371 = vmatpush2.msra.mxu0 0.0
        %1372 = vmatprep.subr.mxu0 0.0
        %1373 = vmatpush2.msra.mxu0 0.0
        %1374 = vmatprep.subr.mxu0 0.0
        %1375 = vmatpush2.msra.mxu0 0.0
        %1376 = vmatprep.subr.mxu0 0.0
        %1377 = vmatpush2.msra.mxu0 0.0
        %1378 = vmatprep.subr.mxu0 0.0
        %1379 = vmatpush2.msra.mxu0 0.0
        %1380 = vmatprep.subr.mxu0 0.0
        %1381 = vmatpush2.msra.mxu0 0.0
        %1382 = vmatprep.subr.mxu0 0.0
        %1383 = vmatpush2.msra.mxu0 0.0
        %1384 = vmatprep.subr.mxu0 0.0
        %1385 = vmatpush2.msra.mxu0 0.0
        %1386 = vmatprep.subr.mxu0 0.0
        %1387 = vmatpush2.msra.mxu0 0.0
        %1388 = vmatprep.subr.mxu0 0.0
        %1389 = vmatpush2.msra.mxu0 0.0
        %1390 = vmatprep.subr.mxu0 0.0
        %1391 = vmatpush2.msra.mxu0 0.0
        %1392 = vmatprep.subr.mxu0 0.0
        %1393 = vmatpush2.msra.mxu0 0.0
        %1394 = vmatprep.mubr.f32.mxu0 0.0
        %1395 = vmatmul.mubr.f32.gmra.mxu0 %v1328
        %v1396 = vpop.f32.mrf.mxu0
        %v1397 = vadd.f32 0.0, %v1396
        %v1398 = vpop.f32.mrf.mxu0
        %1399 = vdwg.mxu0
        %v1401 = vsel %vm756, %v1397, 0
        %1403 = vmatprep.subr.mxu0 0.0
        %1404 = vmatpush1.msra.mxu0 0.0
        %1405 = vmatprep.subr.mxu0 0.0
        %1406 = vmatpush1.msra.mxu0 0.0
        %1407 = vmatprep.subr.mxu0 0.0
        %1408 = vmatpush1.msra.mxu0 0.0
        %1409 = vmatprep.subr.mxu0 0.0
        %1410 = vmatpush1.msra.mxu0 0.0
        %1411 = vmatprep.subr.mxu0 0.0
        %1412 = vmatpush1.msra.mxu0 0.0
        %1413 = vmatprep.subr.mxu0 0.0
        %1414 = vmatpush1.msra.mxu0 0.0
        %1415 = vmatprep.subr.mxu0 0.0
        %1416 = vmatpush1.msra.mxu0 0.0
        %1417 = vmatprep.subr.mxu0 0.0
        %1418 = vmatpush1.msra.mxu0 0.0
        %1419 = vmatprep.subr.mxu0 0.0
        %1420 = vmatpush1.msra.mxu0 0.0
        %1421 = vmatprep.subr.mxu0 0.0
        %1422 = vmatpush1.msra.mxu0 0.0
        %1423 = vmatprep.subr.mxu0 0.0
        %1424 = vmatpush1.msra.mxu0 0.0
        %1425 = vmatprep.subr.mxu0 0.0
        %1426 = vmatpush1.msra.mxu0 0.0
        %1427 = vmatprep.subr.mxu0 0.0
        %1428 = vmatpush1.msra.mxu0 0.0
        %1429 = vmatprep.subr.mxu0 0.0
        %1430 = vmatpush1.msra.mxu0 0.0
        %1431 = vmatprep.subr.mxu0 0.0
        %1432 = vmatpush1.msra.mxu0 0.0
        %1433 = vmatprep.subr.mxu0 0.0
        %1434 = vmatpush1.msra.mxu0 %v749
        %1435 = vmatprep.subr.mxu0 0.0
        %1436 = vmatpush2.msra.mxu0 0.0
        %1437 = vmatprep.subr.mxu0 0.0
        %1438 = vmatpush2.msra.mxu0 0.0
        %1439 = vmatprep.subr.mxu0 0.0
        %1440 = vmatpush2.msra.mxu0 0.0
        %1441 = vmatprep.subr.mxu0 0.0
        %1442 = vmatpush2.msra.mxu0 0.0
        %1443 = vmatprep.subr.mxu0 0.0
        %1444 = vmatpush2.msra.mxu0 0.0
        %1445 = vmatprep.subr.mxu0 0.0
        %1446 = vmatpush2.msra.mxu0 0.0
        %1447 = vmatprep.subr.mxu0 0.0
        %1448 = vmatpush2.msra.mxu0 0.0
        %1449 = vmatprep.subr.mxu0 0.0
        %1450 = vmatpush2.msra.mxu0 0.0
        %1451 = vmatprep.subr.mxu0 0.0
        %1452 = vmatpush2.msra.mxu0 0.0
        %1453 = vmatprep.subr.mxu0 0.0
        %1454 = vmatpush2.msra.mxu0 0.0
        %1455 = vmatprep.subr.mxu0 0.0
        %1456 = vmatpush2.msra.mxu0 0.0
        %1457 = vmatprep.subr.mxu0 0.0
        %1458 = vmatpush2.msra.mxu0 0.0
        %1459 = vmatprep.subr.mxu0 0.0
        %1460 = vmatpush2.msra.mxu0 0.0
        %1461 = vmatprep.subr.mxu0 0.0
        %1462 = vmatpush2.msra.mxu0 0.0
        %1463 = vmatprep.subr.mxu0 0.0
        %1464 = vmatpush2.msra.mxu0 0.0
        %1465 = vmatprep.subr.mxu0 0.0
        %1466 = vmatpush2.msra.mxu0 0.0
        %1467 = vmatprep.mubr.f32.mxu0 0.0
        %1468 = vmatmul.mubr.f32.gmra.mxu0 %v1401
        %v1469 = vpop.f32.mrf.mxu0
        %v1470 = vadd.f32 0.0, %v1469
        %v1471 = vpop.f32.mrf.mxu0
        %1472 = vdwg.mxu0
        %v1473 = vadd.f32 %v1230, %v1470
        %1474 = vrot.lane.b32.xlu0 %v596, 104
        %v1475 = vpop.permute.xlu0 %1474
        %1476 = vrot.lane.b32.xlu0 %v670, 104
        %v1477 = vpop.permute.xlu0 %1476
        %v1478 = vsel %vm756, %v1475, 0
        %v1480 = vsel %vm756, %v1477, 0
        %1482 = vmatprep.subr.mxu0 0.0
        %1483 = vmatpush1.xpose.msra.mxu0 0.0
        %1484 = vmatprep.subr.mxu0 0.0
        %1485 = vmatpush1.xpose.msra.mxu0 0.0
        %1486 = vmatprep.subr.mxu0 0.0
        %1487 = vmatpush1.xpose.msra.mxu0 0.0
        %1488 = vmatprep.subr.mxu0 0.0
        %1489 = vmatpush1.xpose.msra.mxu0 0.0
        %1490 = vmatprep.subr.mxu0 0.0
        %1491 = vmatpush1.xpose.msra.mxu0 0.0
        %1492 = vmatprep.subr.mxu0 0.0
        %1493 = vmatpush1.xpose.msra.mxu0 0.0
        %1494 = vmatprep.subr.mxu0 0.0
        %1495 = vmatpush1.xpose.msra.mxu0 0.0
        %1496 = vmatprep.subr.mxu0 0.0
        %1497 = vmatpush1.xpose.msra.mxu0 0.0
        %1498 = vmatprep.subr.mxu0 0.0
        %1499 = vmatpush1.xpose.msra.mxu0 0.0
        %1500 = vmatprep.subr.mxu0 0.0
        %1501 = vmatpush1.xpose.msra.mxu0 0.0
        %1502 = vmatprep.subr.mxu0 0.0
        %1503 = vmatpush1.xpose.msra.mxu0 0.0
        %1504 = vmatprep.subr.mxu0 0.0
        %1505 = vmatpush1.xpose.msra.mxu0 0.0
        %1506 = vmatprep.subr.mxu0 0.0
        %1507 = vmatpush1.xpose.msra.mxu0 0.0
        %1508 = vmatprep.subr.mxu0 0.0
        %1509 = vmatpush1.xpose.msra.mxu0 0.0
        %1510 = vmatprep.subr.mxu0 0.0
        %1511 = vmatpush1.xpose.msra.mxu0 0.0
        %1512 = vmatprep.subr.mxu0 0.0
        %1513 = vmatpush1.xpose.msra.mxu0 %v1480
        %1514 = vmatprep.subr.mxu0 0.0
        %1515 = vmatpush2.xpose.msra.mxu0 0.0
        %1516 = vmatprep.subr.mxu0 0.0
        %1517 = vmatpush2.xpose.msra.mxu0 0.0
        %1518 = vmatprep.subr.mxu0 0.0
        %1519 = vmatpush2.xpose.msra.mxu0 0.0
        %1520 = vmatprep.subr.mxu0 0.0
        %1521 = vmatpush2.xpose.msra.mxu0 0.0
        %1522 = vmatprep.subr.mxu0 0.0
        %1523 = vmatpush2.xpose.msra.mxu0 0.0
        %1524 = vmatprep.subr.mxu0 0.0
        %1525 = vmatpush2.xpose.msra.mxu0 0.0
        %1526 = vmatprep.subr.mxu0 0.0
        %1527 = vmatpush2.xpose.msra.mxu0 0.0
        %1528 = vmatprep.subr.mxu0 0.0
        %1529 = vmatpush2.xpose.msra.mxu0 0.0
        %1530 = vmatprep.subr.mxu0 0.0
        %1531 = vmatpush2.xpose.msra.mxu0 0.0
        %1532 = vmatprep.subr.mxu0 0.0
        %1533 = vmatpush2.xpose.msra.mxu0 0.0
        %1534 = vmatprep.subr.mxu0 0.0
        %1535 = vmatpush2.xpose.msra.mxu0 0.0
        %1536 = vmatprep.subr.mxu0 0.0
        %1537 = vmatpush2.xpose.msra.mxu0 0.0
        %1538 = vmatprep.subr.mxu0 0.0
        %1539 = vmatpush2.xpose.msra.mxu0 0.0
        %1540 = vmatprep.subr.mxu0 0.0
        %1541 = vmatpush2.xpose.msra.mxu0 0.0
        %1542 = vmatprep.subr.mxu0 0.0
        %1543 = vmatpush2.xpose.msra.mxu0 0.0
        %1544 = vmatprep.subr.mxu0 0.0
        %1545 = vmatpush2.xpose.msra.mxu0 0.0
        %1546 = vmatprep.mubr.f32.mxu0 0.0
        %1547 = vmatmul.mubr.f32.gmra.mxu0 %v1478
        %v1548 = vpop.f32.mrf.mxu0
        %v1549 = vadd.f32 0.0, %v1548
        %v1550 = vpop.f32.mrf.mxu0
        %1551 = vdwg.mxu0
        %v1552 = vmul.f32 %v1549, 0.35355338
        %v1553 = vsel %vm755, %v1552, -1e+30
        %v1554 = vsel %vm756, %v1553, -inf
        %1555 = vmax.xlane.f32.xlu0 %v1554
        %v1556 = vpop.xlane.xlu0 %1555
        %v1557 = vsub.f32 %v1553, %v1556
        %v1558 = vmul.f32 %v1557, 1.442695
        %v1559 = vpow.pop %v1558
        %v1560 = vsel %vm756, %v1559, 0.0
        %1561 = vadd.xlane.f32.xlu0 %v1560
        %v1562 = vpop.xlane.xlu0 %1561
        %v1563 = vrcp.pop %v1562
        %v1564 = vmul.f32 %v1559, %v1563
        %1565 = vrot.lane.b32.xlu0 %v744, 104
        %v1566 = vpop.permute.xlu0 %1565
        %v1569 = vsel %vm756, %v1564, 0
        %1571 = vmatprep.subr.mxu0 0.0
        %1572 = vmatpush1.msra.mxu0 0.0
        %1573 = vmatprep.subr.mxu0 0.0
        %1574 = vmatpush1.msra.mxu0 0.0
        %1575 = vmatprep.subr.mxu0 0.0
        %1576 = vmatpush1.msra.mxu0 0.0
        %1577 = vmatprep.subr.mxu0 0.0
        %1578 = vmatpush1.msra.mxu0 0.0
        %1579 = vmatprep.subr.mxu0 0.0
        %1580 = vmatpush1.msra.mxu0 0.0
        %1581 = vmatprep.subr.mxu0 0.0
        %1582 = vmatpush1.msra.mxu0 0.0
        %1583 = vmatprep.subr.mxu0 0.0
        %1584 = vmatpush1.msra.mxu0 0.0
        %1585 = vmatprep.subr.mxu0 0.0
        %1586 = vmatpush1.msra.mxu0 0.0
        %1587 = vmatprep.subr.mxu0 0.0
        %1588 = vmatpush1.msra.mxu0 0.0
        %1589 = vmatprep.subr.mxu0 0.0
        %1590 = vmatpush1.msra.mxu0 0.0
        %1591 = vmatprep.subr.mxu0 0.0
        %1592 = vmatpush1.msra.mxu0 0.0
        %1593 = vmatprep.subr.mxu0 0.0
        %1594 = vmatpush1.msra.mxu0 0.0
        %1595 = vmatprep.subr.mxu0 0.0
        %1596 = vmatpush1.msra.mxu0 0.0
        %1597 = vmatprep.subr.mxu0 0.0
        %1598 = vmatpush1.msra.mxu0 0.0
        %1599 = vmatprep.subr.mxu0 0.0
        %1600 = vmatpush1.msra.mxu0 0.0
        %1601 = vmatprep.subr.mxu0 0.0
        %1602 = vmatpush1.msra.mxu0 %v1566
        %1603 = vmatprep.subr.mxu0 0.0
        %1604 = vmatpush2.msra.mxu0 0.0
        %1605 = vmatprep.subr.mxu0 0.0
        %1606 = vmatpush2.msra.mxu0 0.0
        %1607 = vmatprep.subr.mxu0 0.0
        %1608 = vmatpush2.msra.mxu0 0.0
        %1609 = vmatprep.subr.mxu0 0.0
        %1610 = vmatpush2.msra.mxu0 0.0
        %1611 = vmatprep.subr.mxu0 0.0
        %1612 = vmatpush2.msra.mxu0 0.0
        %1613 = vmatprep.subr.mxu0 0.0
        %1614 = vmatpush2.msra.mxu0 0.0
        %1615 = vmatprep.subr.mxu0 0.0
        %1616 = vmatpush2.msra.mxu0 0.0
        %1617 = vmatprep.subr.mxu0 0.0
        %1618 = vmatpush2.msra.mxu0 0.0
        %1619 = vmatprep.subr.mxu0 0.0
        %1620 = vmatpush2.msra.mxu0 0.0
        %1621 = vmatprep.subr.mxu0 0.0
        %1622 = vmatpush2.msra.mxu0 0.0
        %1623 = vmatprep.subr.mxu0 0.0
        %1624 = vmatpush2.msra.mxu0 0.0
        %1625 = vmatprep.subr.mxu0 0.0
        %1626 = vmatpush2.msra.mxu0 0.0
        %1627 = vmatprep.subr.mxu0 0.0
        %1628 = vmatpush2.msra.mxu0 0.0
        %1629 = vmatprep.subr.mxu0 0.0
        %1630 = vmatpush2.msra.mxu0 0.0
        %1631 = vmatprep.subr.mxu0 0.0
        %1632 = vmatpush2.msra.mxu0 0.0
        %1633 = vmatprep.subr.mxu0 0.0
        %1634 = vmatpush2.msra.mxu0 0.0
        %1635 = vmatprep.mubr.f32.mxu0 0.0
        %1636 = vmatmul.mubr.f32.gmra.mxu0 %v1569
        %v1637 = vpop.f32.mrf.mxu0
        %v1638 = vadd.f32 0.0, %v1637
        %v1639 = vpop.f32.mrf.mxu0
        %1640 = vdwg.mxu0
        %v1642 = vsel %vm756, %v1638, 0
        %1644 = vmatprep.subr.mxu0 0.0
        %1645 = vmatpush1.msra.mxu0 0.0
        %1646 = vmatprep.subr.mxu0 0.0
        %1647 = vmatpush1.msra.mxu0 0.0
        %1648 = vmatprep.subr.mxu0 0.0
        %1649 = vmatpush1.msra.mxu0 0.0
        %1650 = vmatprep.subr.mxu0 0.0
        %1651 = vmatpush1.msra.mxu0 0.0
        %1652 = vmatprep.subr.mxu0 0.0
        %1653 = vmatpush1.msra.mxu0 0.0
        %1654 = vmatprep.subr.mxu0 0.0
        %1655 = vmatpush1.msra.mxu0 0.0
        %1656 = vmatprep.subr.mxu0 0.0
        %1657 = vmatpush1.msra.mxu0 0.0
        %1658 = vmatprep.subr.mxu0 0.0
        %1659 = vmatpush1.msra.mxu0 0.0
        %1660 = vmatprep.subr.mxu0 0.0
        %1661 = vmatpush1.msra.mxu0 0.0
        %1662 = vmatprep.subr.mxu0 0.0
        %1663 = vmatpush1.msra.mxu0 0.0
        %1664 = vmatprep.subr.mxu0 0.0
        %1665 = vmatpush1.msra.mxu0 0.0
        %1666 = vmatprep.subr.mxu0 0.0
        %1667 = vmatpush1.msra.mxu0 0.0
        %1668 = vmatprep.subr.mxu0 0.0
        %1669 = vmatpush1.msra.mxu0 0.0
        %1670 = vmatprep.subr.mxu0 0.0
        %1671 = vmatpush1.msra.mxu0 0.0
        %1672 = vmatprep.subr.mxu0 0.0
        %1673 = vmatpush1.msra.mxu0 0.0
        %1674 = vmatprep.subr.mxu0 0.0
        %1675 = vmatpush1.msra.mxu0 %v750
        %1676 = vmatprep.subr.mxu0 0.0
        %1677 = vmatpush2.msra.mxu0 0.0
        %1678 = vmatprep.subr.mxu0 0.0
        %1679 = vmatpush2.msra.mxu0 0.0
        %1680 = vmatprep.subr.mxu0 0.0
        %1681 = vmatpush2.msra.mxu0 0.0
        %1682 = vmatprep.subr.mxu0 0.0
        %1683 = vmatpush2.msra.mxu0 0.0
        %1684 = vmatprep.subr.mxu0 0.0
        %1685 = vmatpush2.msra.mxu0 0.0
        %1686 = vmatprep.subr.mxu0 0.0
        %1687 = vmatpush2.msra.mxu0 0.0
        %1688 = vmatprep.subr.mxu0 0.0
        %1689 = vmatpush2.msra.mxu0 0.0
        %1690 = vmatprep.subr.mxu0 0.0
        %1691 = vmatpush2.msra.mxu0 0.0
        %1692 = vmatprep.subr.mxu0 0.0
        %1693 = vmatpush2.msra.mxu0 0.0
        %1694 = vmatprep.subr.mxu0 0.0
        %1695 = vmatpush2.msra.mxu0 0.0
        %1696 = vmatprep.subr.mxu0 0.0
        %1697 = vmatpush2.msra.mxu0 0.0
        %1698 = vmatprep.subr.mxu0 0.0
        %1699 = vmatpush2.msra.mxu0 0.0
        %1700 = vmatprep.subr.mxu0 0.0
        %1701 = vmatpush2.msra.mxu0 0.0
        %1702 = vmatprep.subr.mxu0 0.0
        %1703 = vmatpush2.msra.mxu0 0.0
        %1704 = vmatprep.subr.mxu0 0.0
        %1705 = vmatpush2.msra.mxu0 0.0
        %1706 = vmatprep.subr.mxu0 0.0
        %1707 = vmatpush2.msra.mxu0 0.0
        %1708 = vmatprep.mubr.f32.mxu0 0.0
        %1709 = vmatmul.mubr.f32.gmra.mxu0 %v1642
        %v1710 = vpop.f32.mrf.mxu0
        %v1711 = vadd.f32 0.0, %v1710
        %v1712 = vpop.f32.mrf.mxu0
        %1713 = vdwg.mxu0
        %v1714 = vadd.f32 %v1473, %v1711
        %v1715 = vld [vmem:[%s7] sm:$0x1]
        %v1717 = vlaneseq
        %v1718 = vshrl.u32 %v1717, 7
        %v1719 = vsub.s32 0, %v1718
        %v1720 = vrot.slane %v1715, %v1719
        %v1722 = vadd.f32 %v1714, %v1720
        %v1723 = vadd.f32 %v483, %v1722
        %v1724 = vld [vmem:[%s8] sm:$0x1]
        %v1725 = vld [vmem:[%s9] sm:$0x1]
        %v1726 = vsel %vm486, %v1723, 0.0
        %1727 = vadd.xlane.f32.xlu0 %v1726
        %v1728 = vpop.xlane.xlu0 %1727
        %v1729 = vmul.f32 %v1728, %v490
        %v1730 = vsub.f32 %v1723, %v1729
        %v1731 = vmul.f32 %v1730, %v1730
        %v1732 = vsel %vm486, %v1731, 0.0
        %1733 = vadd.xlane.f32.xlu0 %v1732
        %v1734 = vpop.xlane.xlu0 %1733
        %v1735 = vmul.f32 %v1734, %v490
        %v1736 = vadd.f32 %v1735, 1e-05
        %v1737 = vrsqrt.pop %v1736
        %v1738 = vmul.f32 %v1736, %v1737
        %vm1739 = vcmp.eq.f32.partialorder %v1736, inf
        %v1740 = vsel %vm1739, %v1736, %v1738
        %vm1741 = vcmp.eq.f32.partialorder %v1736, 0.0
        %v1742 = vand.u32 %v1736, 2147483648
        %v1743 = vsel %vm1741, %v1742, %v1740
        %v1744 = vrcp.pop %v1743
        %v1745 = vmul.f32 %v1730, %v1744
        %v1747 = vlaneseq
        %v1748 = vshrl.u32 %v1747, 7
        %v1749 = vsub.s32 0, %v1748
        %v1750 = vrot.slane %v1724, %v1749
        %v1752 = vmul.f32 %v1750, %v1745
        %v1754 = vlaneseq
        %v1755 = vshrl.u32 %v1754, 7
        %v1756 = vsub.s32 0, %v1755
        %v1757 = vrot.slane %v1725, %v1756
        %v1759 = vadd.f32 %v1752, %v1757
        %v1760 = vld [vmem:[%s10] sm:$0xff]
        %v1761 = vld [vmem:[%s10 + $0x8] sm:$0xff]
        %v1762 = vld [vmem:[%s10 + $0x10] sm:$0xff]
        %v1763 = vld [vmem:[%s10 + $0x18] sm:$0xff]
        %v1764 = vld [vmem:[%s11] sm:$0x1]
        %v1766 = vlaneseq
        %v1767 = vshrl.u32 %v1766, 7
        %v1768 = vsub.s32 0, %v1767
        %v1769 = vrot.slane %v1764, %v1768
        %v1772 = vsel %vm486, %v1759, 0
        %1774 = vmatprep.subr.mxu0 0.0
        %1775 = vmatpush1.msra.mxu0 0.0
        %1776 = vmatprep.subr.mxu0 0.0
        %1777 = vmatpush1.msra.mxu0 0.0
        %1778 = vmatprep.subr.mxu0 0.0
        %1779 = vmatpush1.msra.mxu0 0.0
        %1780 = vmatprep.subr.mxu0 0.0
        %1781 = vmatpush1.msra.mxu0 0.0
        %1782 = vmatprep.subr.mxu0 0.0
        %1783 = vmatpush1.msra.mxu0 0.0
        %1784 = vmatprep.subr.mxu0 0.0
        %1785 = vmatpush1.msra.mxu0 0.0
        %1786 = vmatprep.subr.mxu0 0.0
        %1787 = vmatpush1.msra.mxu0 0.0
        %1788 = vmatprep.subr.mxu0 0.0
        %1789 = vmatpush1.msra.mxu0 0.0
        %1790 = vmatprep.subr.mxu0 0.0
        %1791 = vmatpush1.msra.mxu0 0.0
        %1792 = vmatprep.subr.mxu0 0.0
        %1793 = vmatpush1.msra.mxu0 0.0
        %1794 = vmatprep.subr.mxu0 0.0
        %1795 = vmatpush1.msra.mxu0 0.0
        %1796 = vmatprep.subr.mxu0 0.0
        %1797 = vmatpush1.msra.mxu0 0.0
        %1798 = vmatprep.subr.mxu0 0.0
        %1799 = vmatpush1.msra.mxu0 %v1763
        %1800 = vmatprep.subr.mxu0 0.0
        %1801 = vmatpush1.msra.mxu0 %v1762
        %1802 = vmatprep.subr.mxu0 0.0
        %1803 = vmatpush1.msra.mxu0 %v1761
        %1804 = vmatprep.subr.mxu0 0.0
        %1805 = vmatpush1.msra.mxu0 %v1760
        %1806 = vmatprep.subr.mxu0 0.0
        %1807 = vmatpush2.msra.mxu0 0.0
        %1808 = vmatprep.subr.mxu0 0.0
        %1809 = vmatpush2.msra.mxu0 0.0
        %1810 = vmatprep.subr.mxu0 0.0
        %1811 = vmatpush2.msra.mxu0 0.0
        %1812 = vmatprep.subr.mxu0 0.0
        %1813 = vmatpush2.msra.mxu0 0.0
        %1814 = vmatprep.subr.mxu0 0.0
        %1815 = vmatpush2.msra.mxu0 0.0
        %1816 = vmatprep.subr.mxu0 0.0
        %1817 = vmatpush2.msra.mxu0 0.0
        %1818 = vmatprep.subr.mxu0 0.0
        %1819 = vmatpush2.msra.mxu0 0.0
        %1820 = vmatprep.subr.mxu0 0.0
        %1821 = vmatpush2.msra.mxu0 0.0
        %1822 = vmatprep.subr.mxu0 0.0
        %1823 = vmatpush2.msra.mxu0 0.0
        %1824 = vmatprep.subr.mxu0 0.0
        %1825 = vmatpush2.msra.mxu0 0.0
        %1826 = vmatprep.subr.mxu0 0.0
        %1827 = vmatpush2.msra.mxu0 0.0
        %1828 = vmatprep.subr.mxu0 0.0
        %1829 = vmatpush2.msra.mxu0 0.0
        %1830 = vmatprep.subr.mxu0 0.0
        %1831 = vmatpush2.msra.mxu0 0.0
        %1832 = vmatprep.subr.mxu0 0.0
        %1833 = vmatpush2.msra.mxu0 0.0
        %1834 = vmatprep.subr.mxu0 0.0
        %1835 = vmatpush2.msra.mxu0 0.0
        %1836 = vmatprep.subr.mxu0 0.0
        %1837 = vmatpush2.msra.mxu0 0.0
        %1838 = vmatprep.mubr.f32.mxu0 0.0
        %1839 = vmatmul.mubr.f32.gmra.mxu0 %v1772
        %v1840 = vpop.f32.mrf.mxu0
        %v1841 = vadd.f32 %v1769, %v1840
        %v1842 = vpop.f32.mrf.mxu0
        %1843 = vdwg.mxu0
        %v1844 = vmul.f32 %v1841, 0.5
        %v1845 = vmul.f32 %v1841, %v1841
        %v1846 = vmul.f32 %v1845, %v1841
        %v1847 = vmul.f32 %v1846, 0.044715
        %v1848 = vadd.f32 %v1841, %v1847
        %v1849 = vmul.f32 %v1848, 0.7978846
        %v1850 = vtanh.pop %v1849
        %v1851 = vadd.f32 %v1850, 1.0
        %v1852 = vmul.f32 %v1844, %v1851
        %v1853 = vld [vmem:[%s12] sm:$0xff]
        %v1854 = vld [vmem:[%s12 + $0x8] sm:$0xff]
        %v1855 = vld [vmem:[%s12 + $0x10] sm:$0xff]
        %v1856 = vld [vmem:[%s12 + $0x18] sm:$0xff]
        %v1857 = vld [vmem:[%s12 + $0x20] sm:$0xff]
        %v1858 = vld [vmem:[%s12 + $0x28] sm:$0xff]
        %v1859 = vld [vmem:[%s12 + $0x30] sm:$0xff]
        %v1860 = vld [vmem:[%s12 + $0x38] sm:$0xff]
        %v1861 = vld [vmem:[%s12 + $0x40] sm:$0xff]
        %v1862 = vld [vmem:[%s12 + $0x48] sm:$0xff]
        %v1863 = vld [vmem:[%s12 + $0x50] sm:$0xff]
        %v1864 = vld [vmem:[%s12 + $0x58] sm:$0xff]
        %v1865 = vld [vmem:[%s12 + $0x60] sm:$0xff]
        %v1866 = vld [vmem:[%s12 + $0x68] sm:$0xff]
        %v1867 = vld [vmem:[%s12 + $0x70] sm:$0xff]
        %v1868 = vld [vmem:[%s12 + $0x78] sm:$0xff]
        %v1869 = vld [vmem:[%s13] sm:$0x1]
        %v1871 = vlaneseq
        %v1872 = vshrl.u32 %v1871, 7
        %v1873 = vsub.s32 0, %v1872
        %v1874 = vrot.slane %v1869, %v1873
        %1876 = vmatprep.subr.mxu0 0.0
        %1877 = vmatpush1.msra.mxu0 %v1868
        %1878 = vmatprep.subr.mxu0 0.0
        %1879 = vmatpush1.msra.mxu0 %v1867
        %1880 = vmatprep.subr.mxu0 0.0
        %1881 = vmatpush1.msra.mxu0 %v1866
        %1882 = vmatprep.subr.mxu0 0.0
        %1883 = vmatpush1.msra.mxu0 %v1865
        %1884 = vmatprep.subr.mxu0 0.0
        %1885 = vmatpush1.msra.mxu0 %v1864
        %1886 = vmatprep.subr.mxu0 0.0
        %1887 = vmatpush1.msra.mxu0 %v1863
        %1888 = vmatprep.subr.mxu0 0.0
        %1889 = vmatpush1.msra.mxu0 %v1862
        %1890 = vmatprep.subr.mxu0 0.0
        %1891 = vmatpush1.msra.mxu0 %v1861
        %1892 = vmatprep.subr.mxu0 0.0
        %1893 = vmatpush1.msra.mxu0 %v1860
        %1894 = vmatprep.subr.mxu0 0.0
        %1895 = vmatpush1.msra.mxu0 %v1859
        %1896 = vmatprep.subr.mxu0 0.0
        %1897 = vmatpush1.msra.mxu0 %v1858
        %1898 = vmatprep.subr.mxu0 0.0
        %1899 = vmatpush1.msra.mxu0 %v1857
        %1900 = vmatprep.subr.mxu0 0.0
        %1901 = vmatpush1.msra.mxu0 %v1856
        %1902 = vmatprep.subr.mxu0 0.0
        %1903 = vmatpush1.msra.mxu0 %v1855
        %1904 = vmatprep.subr.mxu0 0.0
        %1905 = vmatpush1.msra.mxu0 %v1854
        %1906 = vmatprep.subr.mxu0 0.0
        %1907 = vmatpush1.msra.mxu0 %v1853
        %1908 = vmatprep.subr.mxu0 0.0
        %1909 = vmatpush2.msra.mxu0 0.0
        %1910 = vmatprep.subr.mxu0 0.0
        %1911 = vmatpush2.msra.mxu0 0.0
        %1912 = vmatprep.subr.mxu0 0.0
        %1913 = vmatpush2.msra.mxu0 0.0
        %1914 = vmatprep.subr.mxu0 0.0
        %1915 = vmatpush2.msra.mxu0 0.0
        %1916 = vmatprep.subr.mxu0 0.0
        %1917 = vmatpush2.msra.mxu0 0.0
        %1918 = vmatprep.subr.mxu0 0.0
        %1919 = vmatpush2.msra.mxu0 0.0
        %1920 = vmatprep.subr.mxu0 0.0
        %1921 = vmatpush2.msra.mxu0 0.0
        %1922 = vmatprep.subr.mxu0 0.0
        %1923 = vmatpush2.msra.mxu0 0.0
        %1924 = vmatprep.subr.mxu0 0.0
        %1925 = vmatpush2.msra.mxu0 0.0
        %1926 = vmatprep.subr.mxu0 0.0
        %1927 = vmatpush2.msra.mxu0 0.0
        %1928 = vmatprep.subr.mxu0 0.0
        %1929 = vmatpush2.msra.mxu0 0.0
        %1930 = vmatprep.subr.mxu0 0.0
        %1931 = vmatpush2.msra.mxu0 0.0
        %1932 = vmatprep.subr.mxu0 0.0
        %1933 = vmatpush2.msra.mxu0 0.0
        %1934 = vmatprep.subr.mxu0 0.0
        %1935 = vmatpush2.msra.mxu0 0.0
        %1936 = vmatprep.subr.mxu0 0.0
        %1937 = vmatpush2.msra.mxu0 0.0
        %1938 = vmatprep.subr.mxu0 0.0
        %1939 = vmatpush2.msra.mxu0 0.0
        %1940 = vmatprep.mubr.f32.mxu0 0.0
        %1941 = vmatmul.mubr.f32.gmra.mxu0 %v1852
        %v1942 = vpop.f32.mrf.mxu0
        %v1943 = vadd.f32 %v1874, %v1942
        %v1944 = vpop.f32.mrf.mxu0
        %1945 = vdwg.mxu0
        %v1946 = vadd.f32 %v1723, %v1943
        %1947 = vst.msk [vmem:[%s482] sm:$0xff] %vm486, %v1946
        %s1948 = sand.u32 %s338, 1
        %s1949 = scalar_lea.sflag [#allocation4], %s1948
        %s1950 = sand.u32 %s338, 1
        %s1951 = smul.addr %s1950, 8
        %s1952 = scalar_lea.vmem [#allocation5], %s1951
        // Predicated region
        $region81: #{tpu_custom_call.1} parent=75 // pred_check
          %p1953 = pneg %p348
        $region82: #{tpu_custom_call.1} parent=75 // pred_check_branch
          %1955 = sbr.rel (%p1953) target = $region84
        $region83: #{tpu_custom_call.1} parent=75 // pred_region
          %s1957 = ssub.s32 128, 128
          %1958 = vsyncadd %s1949, %s1957
          %s1959 = smul.addr %s31, 128
          %s1960 = scalar_lea.hbm %s14, %s1959
          %s1962 = sshll.u32 %s1952, 4
          %s1963 = int_to_ptr.vmem [resolvable:$true] %s1962
          %1965 = dma.vmem_to_hbm [thread:$0]  %s1963, 128, %s1960, %s1949
        $region84: #{tpu_custom_call.1} parent=75 // pred_fallthru
          _
      $region76: #{tpu_custom_call.1} parent=5 // pred_fallthru
        _
      %p1966 = scmp.le.s32.totalorder 2, %s26
      // Predicated region
      $region85: #{tpu_custom_call.1} parent=5 // pred_check
        %p1967 = pneg %p1966
      $region86: #{tpu_custom_call.1} parent=5 // pred_check_branch
        %1969 = sbr.rel (%p1967) target = $region88
      $region87: #{tpu_custom_call.1} parent=5 // pred_region
        %s1970 = ssub.s32 %s26, 2
        // Predicated region
        $region89: #{tpu_custom_call.1} parent=87 // pred_check
          %p1971 = pneg %p354
        $region90: #{tpu_custom_call.1} parent=87 // pred_check_branch
          %1973 = sbr.rel (%p1971) target = $region92
        $region91: #{tpu_custom_call.1} parent=87 // pred_region
          %s1974 = sand.u32 %s339, 1
          %s1975 = scalar_lea.sflag [#allocation4], %s1974
          %s1976 = sand.u32 %s339, 1
          %s1977 = smul.addr %s1976, 8
          %s1978 = scalar_lea.vmem [#allocation5], %s1977
          %1979 = dma.done %s1975, 128
        $region92: #{tpu_custom_call.1} parent=87 // pred_fallthru
          _
      $region88: #{tpu_custom_call.1} parent=5 // pred_fallthru
        _
    $region6: #{tpu_custom_call.1} parent=1 // loop_footer
      %s30 = sadd.s32 1, %s26
    $region7: #{tpu_custom_call.1} parent=1 // loop_footer_branch
      %25 = sbr.rel target = $region3
    $region8: #{tpu_custom_call.1} parent=1 // loop_exit
      _
    %1980 = vsyncpa [#allocation3], 1
    %s1981 = scalar_lea.sflag [#allocation3], 1
    %1982 = vsyncpa %s1981, 1
    %1983 = vsyncpa [#allocation4], 1
    %s1984 = scalar_lea.sflag [#allocation4], 1
    %1985 = vsyncpa %s1984, 1

</llo_original>
